<compile_context>
chip_gen: v7x
topology: tpu7x:2x2x1
jax: 0.10.0
libtpu: 0.0.40
codegen_flags: <defaults>
</compile_context>

<pallas_src>
import math

import jax
import jax.numpy as jnp
from jax.experimental import pallas as pl
from jax.experimental.pallas import tpu as pltpu

_MASK_VALUE = -1e30  # large finite negative: avoids -inf - -inf NaNs entirely


def _make_flash_kernel(scale, s_valid, s_padded, mm_dtype):
    """Build the flash-attention kernel body (static params baked in via closure)."""
    needs_mask = s_padded != s_valid

    def kernel(q_ref, k_ref, v_ref, o_ref, qs_ref, m_ref, l_ref, acc_ref):
        ki = pl.program_id(3)
        tk = k_ref.shape[-1]

        @pl.when(ki == 0)
        def _init():
            m_ref[...] = jnp.full_like(m_ref, _MASK_VALUE)
            l_ref[...] = jnp.zeros_like(l_ref)
            acc_ref[...] = jnp.zeros_like(acc_ref)
            # Hoisted out of the kv loop: scale q by 1/sqrt(D) once per q tile
            # (and cast to the MXU dtype once instead of every kv step).
            q = q_ref[0, 0].astype(jnp.float32) * scale          # (Hb, D, tq)
            qs_ref[...] = q.astype(mm_dtype)

        qT = qs_ref[...]                                          # (Hb, D, tq)
        kT = k_ref[0, 0].astype(mm_dtype)                         # (Hb, D, tk)
        vT = v_ref[0, 0].astype(mm_dtype)                         # (Hb, D, tk)

        # s[h, kv, q] = sum_d k[h,d,kv] * q_scaled[h,d,q]   (MXU, f32 accumulate,
        # head axis is a batch dim -> no transposes materialized)
        s = jax.lax.dot_general(
            kT, qT,
            dimension_numbers=(((1,), (1,)), ((0,), (0,))),
            preferred_element_type=jnp.float32)                   # (Hb, tk, tq)

        if needs_mask:
            kv_idx = ki * tk + jax.lax.broadcasted_iota(
                jnp.int32, (1, tk, s.shape[-1]), 1)
            s = jnp.where(kv_idx < s_valid, s, _MASK_VALUE)

        m_prev = m_ref[...]                                       # (Hb, 1, tq)
        m_new = jnp.maximum(m_prev, jnp.max(s, axis=1, keepdims=True))
        alpha = jnp.exp(m_prev - m_new)                           # (Hb, 1, tq)
        p = jnp.exp(s - m_new)                                    # (Hb, tk, tq) f32

        l_ref[...] = alpha * l_ref[...] + jnp.sum(p, axis=1, keepdims=True)

        # acc[h, d, q] += sum_kv v[h,d,kv] * p[h,kv,q]
        pv = jax.lax.dot_general(
            vT, p.astype(mm_dtype),
            dimension_numbers=(((2,), (1,)), ((0,), (0,))),
            preferred_element_type=jnp.float32)                   # (Hb, D, tq)
        acc_ref[...] = alpha * acc_ref[...] + pv
        m_ref[...] = m_new

        @pl.when(ki == pl.num_programs(3) - 1)
        def _finalize():
            l = l_ref[...]
            inv_l = pl.reciprocal(l, approx=True)                 # EUP slot
            inv_l = inv_l * (2.0 - l * inv_l)                     # Newton step -> ~f32
            # Lane-dense store: sequence is the lane dim of the output block.
            o_ref[0] = (acc_ref[...] * inv_l).astype(o_ref.dtype)

    return kernel


def _pick_head_block(H, D):
    """Smallest divisor Hb of H such that Hb*D fills >=64 sublanes; else all heads."""
    for hb in range(1, H + 1):
        if H % hb == 0 and hb * D >= 64:
            return hb
    return H


def _vmem_estimate(hb, D, tq, tk, in_bytes, mm_bytes):
    blocks = 2 * hb * D * (tq + 2 * tk) * in_bytes      # double-buffered q,k,v blocks
    outb = 2 * hb * D * tq * in_bytes                   # double-buffered output block
    scratch = hb * D * tq * (mm_bytes + 4) + 2 * hb * tq * 4
    interm = 2 * hb * tk * tq * 4                       # (Hb, tk, tq) f32 s and p
    return blocks + outb + scratch + interm


def qkv_flash_attention(qkv, num_heads, mxu_bf16=False):
    """Forward pass of QKVFlashAttention.

    qkv: (B, 3*H*D, S)  ->  (B, H*D, S)
    mxu_bf16: run the two matmuls in bf16 (f32 accumulation) when inputs are f32.
    """
    B, C3, S = qkv.shape
    H = num_heads
    assert C3 % (3 * H) == 0, "channel dim must be 3 * num_heads * head_dim"
    D = C3 // (3 * H)

    mm_dtype = jnp.bfloat16 if (mxu_bf16 and qkv.dtype == jnp.float32) else qkv.dtype

    # Head packing for small head dims (amortize per-step overhead, merge DMAs).
    Hb = _pick_head_block(H, D)

    # Pad the sequence to a multiple of 128 (lane-dense tiles everywhere).
    Sp = ((S + 127) // 128) * 128

    # Tile selection: big q tile cuts K/V HBM re-reads (traffic ∝ S/tq); big kv tile
    # cuts per-step online-softmax rescale work (∝ S/tk).
    def _largest_divisor(cands):
        for t in cands:
            if Sp % t == 0:
                return t
        return 128

    tq = _largest_divisor((1024, 512, 256, 128))
    tk = _largest_divisor((512, 256, 128))

    # v7x grid balance: B, head-block and q-tile axes are the "parallel" axes that
    # feed both TensorCores -- make sure there are at least 2 grid points among them.
    while tq > 128 and B * (H // Hb) * (Sp // tq) < 2:
        tq //= 2

    # VMEM budget (v7x has only 64 MiB physical): shrink until the estimate fits.
    in_bytes = qkv.dtype.itemsize
    mm_bytes = jnp.dtype(mm_dtype).itemsize
    budget = 40 * 1024 * 1024
    while _vmem_estimate(Hb, D, tq, tk, in_bytes, mm_bytes) > budget:
        if tk > 128:
            tk //= 2
        elif tq > 128:
            tq //= 2
        elif Hb > 1:
            nh = Hb - 1
            while H % nh:
                nh -= 1
            Hb = nh
        else:
            break

    nq, nk = Sp // tq, Sp // tk
    scale = 1.0 / math.sqrt(D)

    # 'b (t h d) s -> b t h d s' : pure dim-split reshape, no data movement.
    qkv5 = qkv.reshape(B, 3, H, D, S)
    if Sp != S:
        qkv5 = jnp.pad(qkv5, ((0, 0), (0, 0), (0, 0), (0, 0), (0, Sp - S)))

    kernel = _make_flash_kernel(scale, S, Sp, mm_dtype)

    # Index straight into the packed (B, 3, H, D, Sp) tensor: axis-1 index 0/1/2
    # selects q/k/v -- no q/k/v copies or transposes in HBM.
    q_spec = pl.BlockSpec((1, 1, Hb, D, tq), lambda b, h, qi, ki: (b, 0, h, 0, qi))
    k_spec = pl.BlockSpec((1, 1, Hb, D, tk), lambda b, h, qi, ki: (b, 1, h, 0, ki))
    v_spec = pl.BlockSpec((1, 1, Hb, D, tk), lambda b, h, qi, ki: (b, 2, h, 0, ki))
    # Output stays transposed (D on sublanes, S on lanes): lane-dense stores, and the
    # wrapper's final reshape to (B, H*D, S) is a free view.
    o_spec = pl.BlockSpec((1, Hb, D, tq), lambda b, h, qi, ki: (b, h, 0, qi))

    out = pl.pallas_call(
        kernel,
        out_shape=jax.ShapeDtypeStruct((B, H, D, Sp), qkv.dtype),
        grid_spec=pltpu.PrefetchScalarGridSpec(
            num_scalar_prefetch=0,
            grid=(B, H // Hb, nq, nk),            # kv (reduction) axis last
            in_specs=[q_spec, k_spec, v_spec],
            out_specs=o_spec,
            scratch_shapes=[
                pltpu.VMEM((Hb, D, tq), mm_dtype),     # scaled q (hoisted)
                pltpu.VMEM((Hb, 1, tq), jnp.float32),  # running max  m
                pltpu.VMEM((Hb, 1, tq), jnp.float32),  # running sum  l
                pltpu.VMEM((Hb, D, tq), jnp.float32),  # o^T accumulator
            ],
        ),
        compiler_params=pltpu.CompilerParams(
            dimension_semantics=("parallel", "parallel", "parallel", "arbitrary"),
            vmem_limit_bytes=48 * 1024 * 1024,    # fits v7x's 64 MiB physical VMEM
        ),
    )(qkv5, qkv5, qkv5)

    if Sp != S:
        out = out[..., :S]
    # 'b h d s -> b (h d) s' : adjacent-dim merge, no data movement.
    return out.reshape(B, H * D, S)


def _reference(qkv, num_heads):
    """Pure-JAX reference of the PyTorch forward, for a sanity check."""
    B, C3, S = qkv.shape
    H = num_heads
    D = C3 // (3 * H)
    x = qkv.reshape(B, 3, H, D, S)
    x = jnp.transpose(x, (0, 4, 1, 2, 3))          # (B, S, 3, H, D)
    q, k, v = x[:, :, 0], x[:, :, 1], x[:, :, 2]   # (B, S, H, D)
    scale = 1.0 / math.sqrt(D)
    s = jnp.einsum("bqhd,bkhd->bhqk", q, k) * scale
    p = jax.nn.softmax(s, axis=-1)
    o = jnp.einsum("bhqk,bkhd->bqhd", p, v)        # (B, S, H, D)
    return jnp.transpose(o, (0, 2, 3, 1)).reshape(B, H * D, S)


if __name__ == "__main__":
    key_small, key_big = jax.random.split(jax.random.PRNGKey(0))

    # QKVFlashAttention(embed_dim=32, num_heads=4) -> head_dim=8; toy sequence.
    # Exercises head packing (Hb=4) and the pad(8->128)+mask path.
    B, H, D, S = 2, 4, 8, 8
    qkv_small = jax.random.normal(key_small, (B, 3 * H * D, S), dtype=jnp.float32)
    out_small = jax.block_until_ready(qkv_flash_attention(qkv_small, num_heads=H))
    ref_small = _reference(qkv_small, num_heads=H)
    assert out_small.shape == (B, H * D, S)
    assert jnp.allclose(out_small, ref_small, atol=1e-4, rtol=1e-4)

    # Larger shape exercises the enlarged-tile online-softmax path.
    B2, H2, D2, S2 = 1, 2, 64, 512
    qkv_big = jax.random.normal(key_big, (B2, 3 * H2 * D2, S2), dtype=jnp.float32)
    out_big = jax.block_until_ready(qkv_flash_attention(qkv_big, num_heads=H2))
    ref_big = _reference(qkv_big, num_heads=H2)
    assert out_big.shape == (B2, H2 * D2, S2)
    assert jnp.allclose(out_big, ref_big, atol=1e-4, rtol=1e-4)

    # bf16-MXU fast path (review suggestion); looser tolerance vs f32 reference.
    out_bf16 = jax.block_until_ready(
        qkv_flash_attention(qkv_big, num_heads=H2, mxu_bf16=True))
    assert jnp.max(jnp.abs(out_bf16 - ref_big)) < 5e-2

    print("KERNEL_OK")
</pallas_src>

<mosaic_0001>
module attributes {stable_mosaic.version = 11 : i64} {
  func.func @kernel(%arg0: i32, %arg1: i32, %arg2: i32, %arg3: i32, %arg4: memref<1x1x4x8x128xf32, #tpu.memory_space<vmem>>, %arg5: memref<1x1x4x8x128xf32, #tpu.memory_space<vmem>>, %arg6: memref<1x1x4x8x128xf32, #tpu.memory_space<vmem>>, %arg7: memref<1x4x8x128xf32, #tpu.memory_space<vmem>>, %arg8: memref<4x8x128xf32, #tpu.memory_space<vmem>>, %arg9: memref<4x1x128xf32, #tpu.memory_space<vmem>>, %arg10: memref<4x1x128xf32, #tpu.memory_space<vmem>>, %arg11: memref<4x8x128xf32, #tpu.memory_space<vmem>>) attributes {dimension_semantics = [#tpu.dimension_semantics<parallel>, #tpu.dimension_semantics<parallel>, #tpu.dimension_semantics<parallel>, #tpu.dimension_semantics<arbitrary>], iteration_bounds = array<i64: 2, 1, 1, 1>, scalar_prefetch = 0 : i64, scratch_operands = 4 : i64, tpu.core_type = #tpu.core_type<tc>, window_params = [{transform_indices = @transform_0, window_bounds = array<i64: 1, 1, 4, 8, 128>}, {transform_indices = @transform_1, window_bounds = array<i64: 1, 1, 4, 8, 128>}, {transform_indices = @transform_2, window_bounds = array<i64: 1, 1, 4, 8, 128>}, {transform_indices = @transform_3, window_bounds = array<i64: 1, 4, 8, 128>}]} {
    %c0_i32 = arith.constant 0 : i32
    %0 = arith.cmpi eq, %arg3, %c0_i32 : i32
    %1 = arith.extui %0 : i1 to i32
    %c0_i32_0 = arith.constant 0 : i32
    %2 = arith.cmpi ne, %1, %c0_i32_0 : i32
    scf.if %2 {
      %cst_37 = arith.constant -1.000000e+30 : f32
      %44 = vector.broadcast %cst_37 : f32 to vector<4x1x128xf32>
      %c0_38 = arith.constant 0 : index
      %c0_39 = arith.constant 0 : index
      %c0_40 = arith.constant 0 : index
      %45 = vector.load %arg9[%c0_38, %c0_39, %c0_40] : memref<4x1x128xf32, #tpu.memory_space<vmem>>, vector<4x1x128xf32>
      tpu.vector_store %arg9[%c0_38, %c0_39, %c0_40], %44 {strides = array<i32>} : memref<4x1x128xf32, #tpu.memory_space<vmem>>, vector<4x1x128xf32>,
      %cst_41 = arith.constant 0.000000e+00 : f32
      %46 = vector.broadcast %cst_41 : f32 to vector<4x1x128xf32>
      %c0_42 = arith.constant 0 : index
      %c0_43 = arith.constant 0 : index
      %c0_44 = arith.constant 0 : index
      %47 = vector.load %arg10[%c0_42, %c0_43, %c0_44] : memref<4x1x128xf32, #tpu.memory_space<vmem>>, vector<4x1x128xf32>
      tpu.vector_store %arg10[%c0_42, %c0_43, %c0_44], %46 {strides = array<i32>} : memref<4x1x128xf32, #tpu.memory_space<vmem>>, vector<4x1x128xf32>,
      %cst_45 = arith.constant 0.000000e+00 : f32
      %48 = vector.broadcast %cst_45 : f32 to vector<4x8x128xf32>
      %c0_46 = arith.constant 0 : index
      %c0_47 = arith.constant 0 : index
      %c0_48 = arith.constant 0 : index
      %49 = vector.load %arg11[%c0_46, %c0_47, %c0_48] : memref<4x8x128xf32, #tpu.memory_space<vmem>>, vector<4x8x128xf32>
      tpu.vector_store %arg11[%c0_46, %c0_47, %c0_48], %48 {strides = array<i32>} : memref<4x8x128xf32, #tpu.memory_space<vmem>>, vector<4x8x128xf32>,
      %c0_49 = arith.constant 0 : index
      %c0_50 = arith.constant 0 : index
      %c0_51 = arith.constant 0 : index
      %c0_52 = arith.constant 0 : index
      %c0_53 = arith.constant 0 : index
      %50 = vector.load %arg4[%c0_49, %c0_50, %c0_51, %c0_52, %c0_53] : memref<1x1x4x8x128xf32, #tpu.memory_space<vmem>>, vector<1x1x4x8x128xf32>
      %51 = vector.shape_cast %50 : vector<1x1x4x8x128xf32> to vector<4x8x128xf32>
      %cst_54 = arith.constant 0.353553385 : f32
      %52 = vector.broadcast %cst_54 : f32 to vector<4x8x128xf32>
      %53 = arith.mulf %51, %52 : vector<4x8x128xf32>
      %c0_55 = arith.constant 0 : index
      %c0_56 = arith.constant 0 : index
      %c0_57 = arith.constant 0 : index
      %54 = vector.load %arg8[%c0_55, %c0_56, %c0_57] : memref<4x8x128xf32, #tpu.memory_space<vmem>>, vector<4x8x128xf32>
      tpu.vector_store %arg8[%c0_55, %c0_56, %c0_57], %53 {strides = array<i32>} : memref<4x8x128xf32, #tpu.memory_space<vmem>>, vector<4x8x128xf32>,
    } else {
    }
    %c0 = arith.constant 0 : index
    %c0_1 = arith.constant 0 : index
    %c0_2 = arith.constant 0 : index
    %3 = vector.load %arg8[%c0, %c0_1, %c0_2] : memref<4x8x128xf32, #tpu.memory_space<vmem>>, vector<4x8x128xf32>
    %c0_3 = arith.constant 0 : index
    %c0_4 = arith.constant 0 : index
    %c0_5 = arith.constant 0 : index
    %c0_6 = arith.constant 0 : index
    %c0_7 = arith.constant 0 : index
    %4 = vector.load %arg5[%c0_3, %c0_4, %c0_5, %c0_6, %c0_7] : memref<1x1x4x8x128xf32, #tpu.memory_space<vmem>>, vector<1x1x4x8x128xf32>
    %5 = vector.shape_cast %4 : vector<1x1x4x8x128xf32> to vector<4x8x128xf32>
    %c0_8 = arith.constant 0 : index
    %c0_9 = arith.constant 0 : index
    %c0_10 = arith.constant 0 : index
    %c0_11 = arith.constant 0 : index
    %c0_12 = arith.constant 0 : index
    %6 = vector.load %arg6[%c0_8, %c0_9, %c0_10, %c0_11, %c0_12] : memref<1x1x4x8x128xf32, #tpu.memory_space<vmem>>, vector<1x1x4x8x128xf32>
    %7 = vector.shape_cast %6 : vector<1x1x4x8x128xf32> to vector<4x8x128xf32>
    %cst = arith.constant dense<0.000000e+00> : vector<4x128x128xf32>
    %8 = tpu.matmul %5, %3, %cst {dimension_numbers = #tpu.dot_dimension_numbers<[1], [1], [2], [2], [0, 0, 0, 2, 1, 2], [0], [0]>} : vector<4x8x128xf32>, vector<4x8x128xf32>, vector<4x128x128xf32> -> vector<4x128x128xf32>
    %c128_i32 = arith.constant 128 : i32
    %9 = arith.muli %arg3, %c128_i32 : i32
    %10 = tpu.iota {dimensions = array<i32: 1>} : vector<1x128x128xi32>
    %11 = vector.broadcast %9 : i32 to vector<1x128x128xi32>
    %12 = arith.addi %11, %10 : vector<1x128x128xi32>
    %c8_i32 = arith.constant 8 : i32
    %13 = vector.broadcast %c8_i32 : i32 to vector<1x128x128xi32>
    %14 = arith.cmpi slt, %12, %13 : vector<1x128x128xi32>
    %cst_13 = arith.constant -1.000000e+30 : f32
    %15 = vector.shape_cast %14 : vector<1x128x128xi1> to vector<1x128x128xi1>
    %16 = vector.broadcast %15 : vector<1x128x128xi1> to vector<4x128x128xi1>
    %17 = vector.broadcast %cst_13 : f32 to vector<4x128x128xf32>
    %18 = arith.select %16, %8, %17 : vector<4x128x128xi1>, vector<4x128x128xf32>
    %c0_14 = arith.constant 0 : index
    %c0_15 = arith.constant 0 : index
    %c0_16 = arith.constant 0 : index
    %19 = vector.load %arg9[%c0_14, %c0_15, %c0_16] : memref<4x1x128xf32, #tpu.memory_space<vmem>>, vector<4x1x128xf32>
    %cst_17 = arith.constant dense<0xFF800000> : vector<4x128xf32>
    %20 = vector.multi_reduction <maximumf>, %18, %cst_17 [1] : vector<4x128x128xf32> to vector<4x128xf32>
    %21 = vector.shape_cast %20 : vector<4x128xf32> to vector<4x1x128xf32>
    %22 = arith.maximumf %19, %21 : vector<4x1x128xf32>
    %23 = arith.subf %19, %22 : vector<4x1x128xf32>
    %24 = math.exp %23 : vector<4x1x128xf32>
    %25 = vector.broadcast %22 : vector<4x1x128xf32> to vector<4x128x128xf32>
    %26 = arith.subf %18, %25 : vector<4x128x128xf32>
    %27 = math.exp %26 : vector<4x128x128xf32>
    %c0_18 = arith.constant 0 : index
    %c0_19 = arith.constant 0 : index
    %c0_20 = arith.constant 0 : index
    %28 = vector.load %arg10[%c0_18, %c0_19, %c0_20] : memref<4x1x128xf32, #tpu.memory_space<vmem>>, vector<4x1x128xf32>
    %29 = arith.mulf %24, %28 : vector<4x1x128xf32>
    %cst_21 = arith.constant dense<0.000000e+00> : vector<4x128xf32>
    %30 = vector.multi_reduction <add>, %27, %cst_21 [1] : vector<4x128x128xf32> to vector<4x128xf32>
    %31 = vector.shape_cast %30 : vector<4x128xf32> to vector<4x1x128xf32>
    %32 = arith.addf %29, %31 : vector<4x1x128xf32>
    %c0_22 = arith.constant 0 : index
    %c0_23 = arith.constant 0 : index
    %c0_24 = arith.constant 0 : index
    %33 = vector.load %arg10[%c0_22, %c0_23, %c0_24] : memref<4x1x128xf32, #tpu.memory_space<vmem>>, vector<4x1x128xf32>
    tpu.vector_store %arg10[%c0_22, %c0_23, %c0_24], %32 {strides = array<i32>} : memref<4x1x128xf32, #tpu.memory_space<vmem>>, vector<4x1x128xf32>,
    %cst_25 = arith.constant dense<0.000000e+00> : vector<4x8x128xf32>
    %34 = tpu.matmul %7, %27, %cst_25 {dimension_numbers = #tpu.dot_dimension_numbers<[2], [1], [1], [2], [0, 0, 0, 1, 1, 2], [0], [0]>} : vector<4x8x128xf32>, vector<4x128x128xf32>, vector<4x8x128xf32> -> vector<4x8x128xf32>
    %c0_26 = arith.constant 0 : index
    %c0_27 = arith.constant 0 : index
    %c0_28 = arith.constant 0 : index
    %35 = vector.load %arg11[%c0_26, %c0_27, %c0_28] : memref<4x8x128xf32, #tpu.memory_space<vmem>>, vector<4x8x128xf32>
    %36 = vector.broadcast %24 : vector<4x1x128xf32> to vector<4x8x128xf32>
    %37 = arith.mulf %36, %35 : vector<4x8x128xf32>
    %38 = arith.addf %37, %34 : vector<4x8x128xf32>
    %c0_29 = arith.constant 0 : index
    %c0_30 = arith.constant 0 : index
    %c0_31 = arith.constant 0 : index
    %39 = vector.load %arg11[%c0_29, %c0_30, %c0_31] : memref<4x8x128xf32, #tpu.memory_space<vmem>>, vector<4x8x128xf32>
    tpu.vector_store %arg11[%c0_29, %c0_30, %c0_31], %38 {strides = array<i32>} : memref<4x8x128xf32, #tpu.memory_space<vmem>>, vector<4x8x128xf32>,
    %c0_32 = arith.constant 0 : index
    %c0_33 = arith.constant 0 : index
    %c0_34 = arith.constant 0 : index
    %40 = vector.load %arg9[%c0_32, %c0_33, %c0_34] : memref<4x1x128xf32, #tpu.memory_space<vmem>>, vector<4x1x128xf32>
    tpu.vector_store %arg9[%c0_32, %c0_33, %c0_34], %22 {strides = array<i32>} : memref<4x1x128xf32, #tpu.memory_space<vmem>>, vector<4x1x128xf32>,
    %c0_i32_35 = arith.constant 0 : i32
    %41 = arith.cmpi eq, %arg3, %c0_i32_35 : i32
    %42 = arith.extui %41 : i1 to i32
    %c0_i32_36 = arith.constant 0 : i32
    %43 = arith.cmpi ne, %42, %c0_i32_36 : i32
    scf.if %43 {
      %c0_37 = arith.constant 0 : index
      %c0_38 = arith.constant 0 : index
      %c0_39 = arith.constant 0 : index
      %44 = vector.load %arg10[%c0_37, %c0_38, %c0_39] : memref<4x1x128xf32, #tpu.memory_space<vmem>>, vector<4x1x128xf32>
      %45 = tpu.reciprocal %44 {approx = true} : vector<4x1x128xf32> -> vector<4x1x128xf32>
      %46 = arith.mulf %44, %45 : vector<4x1x128xf32>
      %cst_40 = arith.constant 2.000000e+00 : f32
      %47 = vector.broadcast %cst_40 : f32 to vector<4x1x128xf32>
      %48 = arith.subf %47, %46 : vector<4x1x128xf32>
      %49 = arith.mulf %45, %48 : vector<4x1x128xf32>
      %c0_41 = arith.constant 0 : index
      %c0_42 = arith.constant 0 : index
      %c0_43 = arith.constant 0 : index
      %50 = vector.load %arg11[%c0_41, %c0_42, %c0_43] : memref<4x8x128xf32, #tpu.memory_space<vmem>>, vector<4x8x128xf32>
      %51 = vector.broadcast %49 : vector<4x1x128xf32> to vector<4x8x128xf32>
      %52 = arith.mulf %50, %51 : vector<4x8x128xf32>
      %c0_44 = arith.constant 0 : index
      %c0_45 = arith.constant 0 : index
      %c0_46 = arith.constant 0 : index
      %c0_47 = arith.constant 0 : index
      %53 = vector.load %arg7[%c0_44, %c0_45, %c0_46, %c0_47] : memref<1x4x8x128xf32, #tpu.memory_space<vmem>>, vector<1x4x8x128xf32>
      %54 = vector.shape_cast %53 : vector<1x4x8x128xf32> to vector<4x8x128xf32>
      %55 = vector.shape_cast %52 : vector<4x8x128xf32> to vector<1x4x8x128xf32>
      tpu.vector_store %arg7[%c0_44, %c0_45, %c0_46, %c0_47], %55 {strides = array<i32>} : memref<1x4x8x128xf32, #tpu.memory_space<vmem>>, vector<1x4x8x128xf32>,
    } else {
    }
    return
  }
  func.func @transform_0(%arg0: i32, %arg1: i32, %arg2: i32, %arg3: i32) -> (i32, i32, i32, i32, i32) {
    %c0_i32 = arith.constant 0 : i32
    %c0_i32_0 = arith.constant 0 : i32
    %c0_i32_1 = arith.constant 0 : i32
    return %arg0, %c0_i32, %arg1, %c0_i32_0, %arg2 : i32, i32, i32, i32, i32
  }
  func.func @transform_1(%arg0: i32, %arg1: i32, %arg2: i32, %arg3: i32) -> (i32, i32, i32, i32, i32) {
    %c1_i32 = arith.constant 1 : i32
    %c0_i32 = arith.constant 0 : i32
    %c0_i32_0 = arith.constant 0 : i32
    return %arg0, %c1_i32, %arg1, %c0_i32, %arg3 : i32, i32, i32, i32, i32
  }
  func.func @transform_2(%arg0: i32, %arg1: i32, %arg2: i32, %arg3: i32) -> (i32, i32, i32, i32, i32) {
    %c2_i32 = arith.constant 2 : i32
    %c0_i32 = arith.constant 0 : i32
    %c0_i32_0 = arith.constant 0 : i32
    return %arg0, %c2_i32, %arg1, %c0_i32, %arg3 : i32, i32, i32, i32, i32
  }
  func.func @transform_3(%arg0: i32, %arg1: i32, %arg2: i32, %arg3: i32) -> (i32, i32, i32, i32) {
    %c0_i32 = arith.constant 0 : i32
    %c0_i32_0 = arith.constant 0 : i32
    return %arg0, %arg1, %c0_i32, %arg2 : i32, i32, i32, i32
  }
}

</mosaic_0001>

<llo_original>
// kernel: tpu_custom_call.1
$region0: #{tpu_custom_call.1}
  #allocation0 [shape = 'u32[]', space=smem, size = 0x4, offset = 0x4, fixed_abs, tag = 'smem constant byte address 0x4 - core index']
  #allocation1 [shape = 'u32[144,128]{1,0:T(1,128)}', space=vmem, size = 0x12000, scoped, tag = 'internal scratch']
  #allocation2 [shape = 'f32[4,8,128]{2,1,0:T(8,128)}', space=vmem, size = 0x4000, scoped, tag = 'scratch operand']
  #allocation3 [shape = 'f32[4,1,128]{2,1,0:T(1,128)}', space=vmem, size = 0x800, scoped, tag = 'scratch operand']
  #allocation4 [shape = 'f32[4,1,128]{2,1,0:T(1,128)}', space=vmem, size = 0x800, scoped, tag = 'scratch operand']
  #allocation5 [shape = 'f32[4,8,128]{2,1,0:T(8,128)}', space=vmem, size = 0x4000, scoped, tag = 'scratch operand']
  %s0 = inlined_call_operand.hbm [shape: f32[2,3,4,8,128], index: 0, kind: input, shape index: {}]
  %s1 = inlined_call_operand.hbm [shape: f32[2,3,4,8,128], index: 1, kind: input, shape index: {}]
  %s2 = inlined_call_operand.hbm [shape: f32[2,3,4,8,128], index: 2, kind: input, shape index: {}]
  %s3 = inlined_call_operand.hbm [shape: f32[2,4,8,128], index: 3, kind: output, shape index: {}]
  %s4 = sld [smem:[#allocation0]]
  $region65: #{tpu_custom_call.1} parent=0
    _
  %s6 = ssub.s32 1, %s4
  %s7 = scalar_select 0, %s6, %s4
  $region1: #{tpu_custom_call.1} parent=0
    #allocation6 [shape = 'u8[32768]{0}', space=vmem, size = 0x8000, scoped, tag = 'input window, operand 0']
    #allocation7 [shape = 's32[2]{0}', space=sflag, size = 0x8, scoped, tag = 'scoped memory for tpu_custom_call.1']
    #allocation8 [shape = 's32[2]{0}', space=sflag, size = 0x8, scoped, tag = 'scoped memory for tpu_custom_call.1']
    #allocation9 [shape = 'u8[32768]{0}', space=vmem, size = 0x8000, scoped, tag = 'input window, operand 1']
    #allocation10 [shape = 's32[2]{0}', space=sflag, size = 0x8, scoped, tag = 'scoped memory for tpu_custom_call.1']
    #allocation11 [shape = 'u8[32768]{0}', space=vmem, size = 0x8000, scoped, tag = 'input window, operand 2']
    #allocation12 [shape = 'u8[32768]{0}', space=vmem, size = 0x8000, scoped, tag = 'output window, operand 0']
    %8 = vsyncpa [#allocation7], 0
    %s9 = scalar_lea.sflag [#allocation7], 1
    %10 = vsyncpa %s9, 0
    %11 = vsyncpa [#allocation10], 0
    %s12 = scalar_lea.sflag [#allocation10], 1
    %13 = vsyncpa %s12, 0
    %14 = vsyncpa [#allocation8], 0
    %s15 = scalar_lea.sflag [#allocation8], 1
    %16 = vsyncpa %s15, 0
    loop: start=0, step=1, limit=4
    $region2: #{tpu_custom_call.1} parent=1 // loop_pre_header
      _
    $region3: #{tpu_custom_call.1} parent=1 // loop_header
      %s18 = sphi 0, %s22
      %p19 = scmp.ge.s32.totalorder %s18, 4
      %s25 = sphi 0, %s51
      %s26 = sphi 0, %s47
      %s27 = sphi 0, %s43
      %s28 = sphi 0, %s39
      %s29 = sphi 0, %s25
      %s30 = sphi 0, %s26
      %s31 = sphi 0, %s27
      %s32 = sphi 0, %s28
      %s33 = sphi 0, %s29
      %s34 = sphi 0, %s30
      %s35 = sphi 0, %s31
      %s36 = sphi 0, %s32
      %s58 = sphi 0, %s60
      %s61 = sphi 0, %s58
      %s62 = sphi 0, %s61
      %s78 = sphi 0, %s62
      %s88 = sphi 0, %s90
      %s91 = sphi 0, %s88
      %s92 = sphi 0, %s91
      %s108 = sphi 0, %s92
      %s118 = sphi 0, %s120
      %s121 = sphi 0, %s118
      %s122 = sphi 0, %s121
      %s138 = sphi 0, %s122
      %s148 = sphi 0, %s150
      %s151 = sphi 0, %s148
      %s152 = sphi 0, %s151
      %s168 = sphi 0, %s152
    $region4: #{tpu_custom_call.1} parent=1 // loop_header_branch
      %21 = sbr.rel (%p19) target = $region8
    $region5: #{tpu_custom_call.1} parent=1 // loop_body
      %s23 = ssub.s32 %s18, 1
      %s24 = ssub.s32 %s18, 2
      %s37 = sadd.s32 1, %s28
      %p38 = scmp.ge.s32.totalorder %s37, 1
      %s39 = scalar_select %p38, 0, %s37
      %s40 = sadd.s32 1, %s27
      %s41 = scalar_select %p38, %s40, %s27
      %p42 = scmp.ge.s32.totalorder %s41, 1
      %s43 = scalar_select %p42, 0, %s41
      %s44 = sadd.s32 1, %s26
      %s45 = scalar_select %p42, %s44, %s26
      %p46 = scmp.ge.s32.totalorder %s45, 1
      %s47 = scalar_select %p46, 0, %s45
      %s48 = sadd.s32 1, %s25
      %s49 = scalar_select %p46, %s48, %s25
      %p50 = scmp.ge.s32.totalorder %s49, 2
      %s51 = scalar_select %p50, 0, %s49
      %s52 = ssub.s32 %s25, %s51
      %s53 = ssub.s32 %s26, %s47
      %s54 = sor.u32 %s52, %s53
      %s55 = ssub.s32 %s27, %s43
      %s56 = sor.u32 %s54, %s55
      %p57 = scmp.eq.s32.totalorder %s56, 0
      %s59 = sadd.s32 %s58, 1
      %s60 = scalar_select %p57, %s58, %s59
      %p63 = pneg %p57
      %p64 = scmp.eq.s32.totalorder %s18, 1
      %p65 = por %p63, %p64
      %p66 = scmp.ne.s32.totalorder %s58, %s61
      %p67 = scmp.eq.s32.totalorder %s18, 0
      %p68 = por %p66, %p67
      %p69 = scmp.ne.s32.totalorder %s58, %s61
      %p70 = scmp.eq.s32.totalorder %s23, 1
      %p71 = por %p69, %p70
      %p72 = scmp.ne.s32.totalorder %s61, %s62
      %p73 = scmp.eq.s32.totalorder %s23, 0
      %p74 = por %p72, %p73
      %p75 = scmp.ne.s32.totalorder %s61, %s62
      %p76 = scmp.eq.s32.totalorder %s24, 1
      %p77 = por %p75, %p76
      %p79 = scmp.ne.s32.totalorder %s62, %s78
      %p80 = scmp.eq.s32.totalorder %s24, 0
      %p81 = por %p79, %p80
      %s82 = ssub.s32 %s25, %s51
      %s83 = ssub.s32 %s26, %s47
      %s84 = sor.u32 %s82, %s83
      %s85 = ssub.s32 %s28, %s39
      %s86 = sor.u32 %s84, %s85
      %p87 = scmp.eq.s32.totalorder %s86, 0
      %s89 = sadd.s32 %s88, 1
      %s90 = scalar_select %p87, %s88, %s89
      %p93 = pneg %p87
      %p94 = scmp.eq.s32.totalorder %s18, 1
      %p95 = por %p93, %p94
      %p96 = scmp.ne.s32.totalorder %s88, %s91
      %p97 = scmp.eq.s32.totalorder %s18, 0
      %p98 = por %p96, %p97
      %p99 = scmp.ne.s32.totalorder %s88, %s91
      %p100 = scmp.eq.s32.totalorder %s23, 1
      %p101 = por %p99, %p100
      %p102 = scmp.ne.s32.totalorder %s91, %s92
      %p103 = scmp.eq.s32.totalorder %s23, 0
      %p104 = por %p102, %p103
      %p105 = scmp.ne.s32.totalorder %s91, %s92
      %p106 = scmp.eq.s32.totalorder %s24, 1
      %p107 = por %p105, %p106
      %p109 = scmp.ne.s32.totalorder %s92, %s108
      %p110 = scmp.eq.s32.totalorder %s24, 0
      %p111 = por %p109, %p110
      %s112 = ssub.s32 %s25, %s51
      %s113 = ssub.s32 %s26, %s47
      %s114 = sor.u32 %s112, %s113
      %s115 = ssub.s32 %s28, %s39
      %s116 = sor.u32 %s114, %s115
      %p117 = scmp.eq.s32.totalorder %s116, 0
      %s119 = sadd.s32 %s118, 1
      %s120 = scalar_select %p117, %s118, %s119
      %p123 = pneg %p117
      %p124 = scmp.eq.s32.totalorder %s18, 1
      %p125 = por %p123, %p124
      %p126 = scmp.ne.s32.totalorder %s118, %s121
      %p127 = scmp.eq.s32.totalorder %s18, 0
      %p128 = por %p126, %p127
      %p129 = scmp.ne.s32.totalorder %s118, %s121
      %p130 = scmp.eq.s32.totalorder %s23, 1
      %p131 = por %p129, %p130
      %p132 = scmp.ne.s32.totalorder %s121, %s122
      %p133 = scmp.eq.s32.totalorder %s23, 0
      %p134 = por %p132, %p133
      %p135 = scmp.ne.s32.totalorder %s121, %s122
      %p136 = scmp.eq.s32.totalorder %s24, 1
      %p137 = por %p135, %p136
      %p139 = scmp.ne.s32.totalorder %s122, %s138
      %p140 = scmp.eq.s32.totalorder %s24, 0
      %p141 = por %p139, %p140
      %s142 = ssub.s32 %s25, %s51
      %s143 = ssub.s32 %s26, %s47
      %s144 = sor.u32 %s142, %s143
      %s145 = ssub.s32 %s27, %s43
      %s146 = sor.u32 %s144, %s145
      %p147 = scmp.eq.s32.totalorder %s146, 0
      %s149 = sadd.s32 %s148, 1
      %s150 = scalar_select %p147, %s148, %s149
      %p153 = pneg %p147
      %p154 = scmp.eq.s32.totalorder %s18, 1
      %p155 = por %p153, %p154
      %p156 = scmp.ne.s32.totalorder %s148, %s151
      %p157 = scmp.eq.s32.totalorder %s18, 0
      %p158 = por %p156, %p157
      %p159 = scmp.ne.s32.totalorder %s148, %s151
      %p160 = scmp.eq.s32.totalorder %s23, 1
      %p161 = por %p159, %p160
      %p162 = scmp.ne.s32.totalorder %s151, %s152
      %p163 = scmp.eq.s32.totalorder %s23, 0
      %p164 = por %p162, %p163
      %p165 = scmp.ne.s32.totalorder %s151, %s152
      %p166 = scmp.eq.s32.totalorder %s24, 1
      %p167 = por %p165, %p166
      %p169 = scmp.ne.s32.totalorder %s152, %s168
      %p170 = scmp.eq.s32.totalorder %s24, 0
      %p171 = por %p169, %p170
      %p172 = scmp.le.s32.totalorder 1, %s18
      %p173 = scmp.lt.s32.totalorder %s18, 3
      %p174 = pnand %p172, %p173
      %p175 = pneg %p174
      // Predicated region
      $region9: #{tpu_custom_call.1} parent=5 // pred_check
        _
      $region10: #{tpu_custom_call.1} parent=5 // pred_check_branch
        %177 = sbr.rel (%p174) target = $region12
      $region11: #{tpu_custom_call.1} parent=5 // pred_region
        %s178 = ssub.s32 %s18, 1
      $region12: #{tpu_custom_call.1} parent=5 // pred_fallthru
        _
      %p179 = scmp.lt.s32.totalorder %s18, 2
      // Predicated region
      $region13: #{tpu_custom_call.1} parent=5 // pred_check
        %p180 = pneg %p179
      $region14: #{tpu_custom_call.1} parent=5 // pred_check_branch
        %182 = sbr.rel (%p180) target = $region16
      $region15: #{tpu_custom_call.1} parent=5 // pred_region
        // Predicated region
        $region17: #{tpu_custom_call.1} parent=15 // pred_check
          %p183 = pneg %p68
        $region18: #{tpu_custom_call.1} parent=15 // pred_check_branch
          %185 = sbr.rel (%p183) target = $region20
        $region19: #{tpu_custom_call.1} parent=15 // pred_region
          %s186 = sand.u32 %s58, 1
          %s187 = scalar_lea.sflag [#allocation7], %s186
          %s188 = sand.u32 %s58, 1
          %s189 = smul.addr %s188, 32
          %s190 = scalar_lea.vmem [#allocation6], %s189
          %s191 = smul.u32 4, %s26
          %s193 = ssub.s32 512, 512
          %194 = vsyncadd %s187, %s193
          %s195 = sadd.s32 %s27, %s191
          %s196 = smul.addr %s25, 12
          %s197 = sadd.s32 %s195, %s196
          %s198 = smul.addr %s197, 128
          %s199 = scalar_lea.hbm %s0, %s198
          %s200 = sshll.u32 %s190, 4
          %s201 = int_to_ptr.vmem [resolvable:$true] %s200
          %206 = dma.hbm_to_vmem [thread:$0]  %s199, 512, %s201, %s187, 128, 128, 8
        $region20: #{tpu_custom_call.1} parent=15 // pred_fallthru
          _
        // Predicated region
        $region21: #{tpu_custom_call.1} parent=15 // pred_check
          %p207 = pneg %p98
        $region22: #{tpu_custom_call.1} parent=15 // pred_check_branch
          %209 = sbr.rel (%p207) target = $region24
        $region23: #{tpu_custom_call.1} parent=15 // pred_region
          %s210 = sand.u32 %s18, 1
          %s211 = scalar_lea.sflag [#allocation10], %s210
          %s212 = sand.u32 %s88, 1
          %s213 = smul.addr %s212, 32
          %s214 = scalar_lea.vmem [#allocation9], %s213
          %s215 = smul.u32 4, %s26
          %s217 = ssub.s32 512, 512
          %218 = vsyncadd %s211, %s217
          %s219 = sadd.s32 %s28, %s215
          %s220 = sadd.s32 %s219, 4
          %s221 = smul.addr %s25, 12
          %s222 = sadd.s32 %s220, %s221
          %s223 = smul.addr %s222, 128
          %s224 = scalar_lea.hbm %s1, %s223
          %s225 = sshll.u32 %s214, 4
          %s226 = int_to_ptr.vmem [resolvable:$true] %s225
          %231 = dma.hbm_to_vmem [thread:$0]  %s224, 512, %s226, %s211, 128, 128, 8
        $region24: #{tpu_custom_call.1} parent=15 // pred_fallthru
          _
        // Predicated region
        $region25: #{tpu_custom_call.1} parent=15 // pred_check
          %p232 = pneg %p128
        $region26: #{tpu_custom_call.1} parent=15 // pred_check_branch
          %234 = sbr.rel (%p232) target = $region28
        $region27: #{tpu_custom_call.1} parent=15 // pred_region
          %s235 = sand.u32 %s18, 1
          %s236 = scalar_lea.sflag [#allocation10], %s235
          %s237 = sand.u32 %s118, 1
          %s238 = smul.addr %s237, 32
          %s239 = scalar_lea.vmem [#allocation11], %s238
          %s240 = smul.u32 4, %s26
          %s242 = ssub.s32 512, 512
          %243 = vsyncadd %s236, %s242
          %s244 = sadd.s32 %s28, %s240
          %s245 = sadd.s32 %s244, 8
          %s246 = smul.addr %s25, 12
          %s247 = sadd.s32 %s245, %s246
          %s248 = smul.addr %s247, 128
          %s249 = scalar_lea.hbm %s2, %s248
          %s250 = sshll.u32 %s239, 4
          %s251 = int_to_ptr.vmem [resolvable:$true] %s250
          %256 = dma.hbm_to_vmem [thread:$0]  %s249, 512, %s251, %s236, 128, 128, 8
        $region28: #{tpu_custom_call.1} parent=15 // pred_fallthru
          _
      $region16: #{tpu_custom_call.1} parent=5 // pred_fallthru
        _
      %p257 = scmp.le.s32.totalorder 1, %s18
      %p258 = scmp.lt.s32.totalorder %s18, 3
      %p259 = pnand %p257, %p258
      %p260 = pneg %p259
      // Predicated region
      $region29: #{tpu_custom_call.1} parent=5 // pred_check
        _
      $region30: #{tpu_custom_call.1} parent=5 // pred_check_branch
        %262 = sbr.rel (%p259) target = $region32
      $region31: #{tpu_custom_call.1} parent=5 // pred_region
        %s263 = ssub.s32 %s18, 1
        %s264 = sand.u32 %s61, 1
        %s265 = scalar_lea.sflag [#allocation7], %s264
        %s266 = sand.u32 %s61, 1
        %s267 = smul.addr %s266, 32
        %s268 = scalar_lea.vmem [#allocation6], %s267
        // Predicated region
        $region33: #{tpu_custom_call.1} parent=31 // pred_check
          %p269 = pneg %p74
        $region34: #{tpu_custom_call.1} parent=31 // pred_check_branch
          %271 = sbr.rel (%p269) target = $region36
        $region35: #{tpu_custom_call.1} parent=31 // pred_region
          %272 = dma.done %s265, 512
        $region36: #{tpu_custom_call.1} parent=31 // pred_fallthru
          _
        %s273 = sand.u32 %s23, 1
        %s274 = scalar_lea.sflag [#allocation10], %s273
        %s275 = sand.u32 %s91, 1
        %s276 = smul.addr %s275, 32
        %s277 = scalar_lea.vmem [#allocation9], %s276
        // Predicated region
        $region37: #{tpu_custom_call.1} parent=31 // pred_check
          %p278 = pneg %p104
        $region38: #{tpu_custom_call.1} parent=31 // pred_check_branch
          %280 = sbr.rel (%p278) target = $region40
        $region39: #{tpu_custom_call.1} parent=31 // pred_region
          %281 = dma.done %s274, 512
        $region40: #{tpu_custom_call.1} parent=31 // pred_fallthru
          _
        %s282 = sand.u32 %s23, 1
        %s283 = scalar_lea.sflag [#allocation10], %s282
        %s284 = sand.u32 %s121, 1
        %s285 = smul.addr %s284, 32
        %s286 = scalar_lea.vmem [#allocation11], %s285
        // Predicated region
        $region41: #{tpu_custom_call.1} parent=31 // pred_check
          %p287 = pneg %p134
        $region42: #{tpu_custom_call.1} parent=31 // pred_check_branch
          %289 = sbr.rel (%p287) target = $region44
        $region43: #{tpu_custom_call.1} parent=31 // pred_region
          %290 = dma.done %s283, 512
        $region44: #{tpu_custom_call.1} parent=31 // pred_fallthru
          _
        %s291 = sand.u32 %s61, 1
        %s292 = scalar_lea.sflag [#allocation7], %s291
        %s293 = sand.u32 %s61, 1
        %s294 = smul.addr %s293, 32
        %s295 = scalar_lea.vmem [#allocation6], %s294
        %p296 = pneg %p74
        %p297 = pneg %p71
        %s298 = sand.u32 %s23, 1
        %s299 = scalar_lea.sflag [#allocation10], %s298
        %s300 = sand.u32 %s91, 1
        %s301 = smul.addr %s300, 32
        %s302 = scalar_lea.vmem [#allocation9], %s301
        %p303 = pneg %p104
        %p304 = pneg %p101
        %s305 = sand.u32 %s23, 1
        %s306 = scalar_lea.sflag [#allocation10], %s305
        %s307 = sand.u32 %s121, 1
        %s308 = smul.addr %s307, 32
        %s309 = scalar_lea.vmem [#allocation11], %s308
        %p310 = pneg %p134
        %p311 = pneg %p131
        %p312 = pneg %p164
        %p313 = pneg %p161
        %s314 = sand.u32 %s151, 1
        %s315 = scalar_lea.sflag [#allocation8], %s314
        %s316 = sand.u32 %s151, 1
        %s317 = smul.addr %s316, 32
        %s318 = scalar_lea.vmem [#allocation12], %s317
        %s319 = smul.u32 4, %s30
        %s320 = smul.u32 4, %s30
        %s321 = smul.u32 4, %s30
        %s322 = smul.u32 4, %s30
        %p323 = scmp.eq.s32.totalorder %s32, 0
        // Predicated region
        $region45: #{tpu_custom_call.1} parent=31 // pred_check
          %p324 = pneg %p323
        $region46: #{tpu_custom_call.1} parent=31 // pred_check_branch
          %326 = sbr.rel (%p324) target = $region48
        $region47: #{tpu_custom_call.1} parent=31 // pred_region
          %327 = vst [vmem:[#allocation3] sm:$0x1] -1e+30
          %328 = vst [vmem:[#allocation3 + $0x1] sm:$0x1] -1e+30
          %329 = vst [vmem:[#allocation3 + $0x2] sm:$0x1] -1e+30
          %330 = vst [vmem:[#allocation3 + $0x3] sm:$0x1] -1e+30
          %331 = vst [vmem:[#allocation4] sm:$0x1] 0.0
          %332 = vst [vmem:[#allocation4 + $0x1] sm:$0x1] 0.0
          %333 = vst [vmem:[#allocation4 + $0x2] sm:$0x1] 0.0
          %334 = vst [vmem:[#allocation4 + $0x3] sm:$0x1] 0.0
          %335 = vst [vmem:[#allocation5] sm:$0xff] 0.0
          %336 = vst [vmem:[#allocation5 + $0x8] sm:$0xff] 0.0
          %337 = vst [vmem:[#allocation5 + $0x10] sm:$0xff] 0.0
          %338 = vst [vmem:[#allocation5 + $0x18] sm:$0xff] 0.0
          %v339 = vld [vmem:[%s268] sm:$0xff]
          %v340 = vld [vmem:[%s268 + $0x8] sm:$0xff]
          %v341 = vld [vmem:[%s268 + $0x10] sm:$0xff]
          %v342 = vld [vmem:[%s268 + $0x18] sm:$0xff]
          %v343 = vmul.f32 %v339, 0.35355338
          %v344 = vmul.f32 %v340, 0.35355338
          %v345 = vmul.f32 %v341, 0.35355338
          %v346 = vmul.f32 %v342, 0.35355338
          %347 = vst [vmem:[#allocation2] sm:$0xff] %v343
          %348 = vst [vmem:[#allocation2 + $0x8] sm:$0xff] %v344
          %349 = vst [vmem:[#allocation2 + $0x10] sm:$0xff] %v345
          %350 = vst [vmem:[#allocation2 + $0x18] sm:$0xff] %v346
        $region48: #{tpu_custom_call.1} parent=31 // pred_fallthru
          _
        %v351 = vld [vmem:[#allocation2] sm:$0xff]
        %v352 = vld [vmem:[#allocation2 + $0x8] sm:$0xff]
        %v353 = vld [vmem:[#allocation2 + $0x10] sm:$0xff]
        %v354 = vld [vmem:[#allocation2 + $0x18] sm:$0xff]
        %v355 = vld [vmem:[%s277] sm:$0xff]
        %v356 = vld [vmem:[%s277 + $0x8] sm:$0xff]
        %v357 = vld [vmem:[%s277 + $0x10] sm:$0xff]
        %v358 = vld [vmem:[%s277 + $0x18] sm:$0xff]
        %v359 = vld [vmem:[%s286] sm:$0xff]
        %v360 = vld [vmem:[%s286 + $0x8] sm:$0xff]
        %v361 = vld [vmem:[%s286 + $0x10] sm:$0xff]
        %v362 = vld [vmem:[%s286 + $0x18] sm:$0xff]
        %363 = vxpose.xlu0.b32.start [1/16] %v355, 128
        %364 = vxpose.xlu0.b32.cont [2/16] 0.0, 128
        %365 = vxpose.xlu0.b32.cont [3/16] 0.0, 128
        %366 = vxpose.xlu0.b32.cont [4/16] 0.0, 128
        %367 = vxpose.xlu0.b32.cont [5/16] 0.0, 128
        %368 = vxpose.xlu0.b32.cont [6/16] 0.0, 128
        %369 = vxpose.xlu0.b32.cont [7/16] 0.0, 128
        %370 = vxpose.xlu0.b32.cont [8/16] 0.0, 128
        %371 = vxpose.xlu0.b32.cont [9/16] 0.0, 128
        %372 = vxpose.xlu0.b32.cont [10/16] 0.0, 128
        %373 = vxpose.xlu0.b32.cont [11/16] 0.0, 128
        %374 = vxpose.xlu0.b32.cont [12/16] 0.0, 128
        %375 = vxpose.xlu0.b32.cont [13/16] 0.0, 128
        %376 = vxpose.xlu0.b32.cont [14/16] 0.0, 128
        %377 = vxpose.xlu0.b32.cont [15/16] 0.0, 128
        %378 = vxpose.xlu0.b32.end [16/16] 0.0, 128
        %v379 = vpop.trf.xlu0
        %v380 = vpop.trf.xlu0
        %v381 = vpop.trf.xlu0
        %v382 = vpop.trf.xlu0
        %v383 = vpop.trf.xlu0
        %v384 = vpop.trf.xlu0
        %v385 = vpop.trf.xlu0
        %v386 = vpop.trf.xlu0
        %v387 = vpop.trf.xlu0
        %v388 = vpop.trf.xlu0
        %v389 = vpop.trf.xlu0
        %v390 = vpop.trf.xlu0
        %v391 = vpop.trf.xlu0
        %v392 = vpop.trf.xlu0
        %v393 = vpop.trf.xlu0
        %v394 = vpop.trf.xlu0
        %vm395 = vcmask 64512
        %v397 = vsel %vm395, %v379, 0
        %v400 = vsel %vm395, %v380, 0
        %v403 = vsel %vm395, %v381, 0
        %v406 = vsel %vm395, %v382, 0
        %v409 = vsel %vm395, %v383, 0
        %v412 = vsel %vm395, %v384, 0
        %v415 = vsel %vm395, %v385, 0
        %v418 = vsel %vm395, %v386, 0
        %v421 = vsel %vm395, %v387, 0
        %v424 = vsel %vm395, %v388, 0
        %v427 = vsel %vm395, %v389, 0
        %v430 = vsel %vm395, %v390, 0
        %v433 = vsel %vm395, %v391, 0
        %v436 = vsel %vm395, %v392, 0
        %v439 = vsel %vm395, %v393, 0
        %v442 = vsel %vm395, %v394, 0
        %444 = vmatprep.subr.mxu0 0.0
        %445 = vmatpush1.msra.mxu0 %v351
        %446 = vmatprep.subr.mxu0 0.0
        %447 = vmatpush1.msra.mxu0 0.0
        %448 = vmatprep.subr.mxu0 0.0
        %449 = vmatpush1.msra.mxu0 0.0
        %450 = vmatprep.subr.mxu0 0.0
        %451 = vmatpush1.msra.mxu0 0.0
        %452 = vmatprep.subr.mxu0 0.0
        %453 = vmatpush1.msra.mxu0 0.0
        %454 = vmatprep.subr.mxu0 0.0
        %455 = vmatpush1.msra.mxu0 0.0
        %456 = vmatprep.subr.mxu0 0.0
        %457 = vmatpush1.msra.mxu0 0.0
        %458 = vmatprep.subr.mxu0 0.0
        %459 = vmatpush1.msra.mxu0 0.0
        %460 = vmatprep.subr.mxu0 0.0
        %461 = vmatpush1.msra.mxu0 0.0
        %462 = vmatprep.subr.mxu0 0.0
        %463 = vmatpush1.msra.mxu0 0.0
        %464 = vmatprep.subr.mxu0 0.0
        %465 = vmatpush1.msra.mxu0 0.0
        %466 = vmatprep.subr.mxu0 0.0
        %467 = vmatpush1.msra.mxu0 0.0
        %468 = vmatprep.subr.mxu0 0.0
        %469 = vmatpush1.msra.mxu0 0.0
        %470 = vmatprep.subr.mxu0 0.0
        %471 = vmatpush1.msra.mxu0 0.0
        %472 = vmatprep.subr.mxu0 0.0
        %473 = vmatpush1.msra.mxu0 0.0
        %474 = vmatprep.subr.mxu0 0.0
        %475 = vmatpush1.msra.mxu0 0.0
        %476 = vmatprep.subr.mxu0 0.0
        %477 = vmatpush1.msra.mxu0 0.0
        %478 = vmatprep.subr.mxu0 0.0
        %479 = vmatpush1.msra.mxu0 0.0
        %480 = vmatprep.subr.mxu0 0.0
        %481 = vmatpush1.msra.mxu0 0.0
        %482 = vmatprep.subr.mxu0 0.0
        %483 = vmatpush1.msra.mxu0 0.0
        %484 = vmatprep.subr.mxu0 0.0
        %485 = vmatpush1.msra.mxu0 0.0
        %486 = vmatprep.subr.mxu0 0.0
        %487 = vmatpush1.msra.mxu0 0.0
        %488 = vmatprep.subr.mxu0 0.0
        %489 = vmatpush1.msra.mxu0 0.0
        %490 = vmatprep.subr.mxu0 0.0
        %491 = vmatpush1.msra.mxu0 0.0
        %492 = vmatprep.subr.mxu0 0.0
        %493 = vmatpush1.msra.mxu0 0.0
        %494 = vmatprep.subr.mxu0 0.0
        %495 = vmatpush1.msra.mxu0 0.0
        %496 = vmatprep.subr.mxu0 0.0
        %497 = vmatpush1.msra.mxu0 0.0
        %498 = vmatprep.subr.mxu0 0.0
        %499 = vmatpush1.msra.mxu0 0.0
        %500 = vmatprep.subr.mxu0 0.0
        %501 = vmatpush1.msra.mxu0 0.0
        %502 = vmatprep.subr.mxu0 0.0
        %503 = vmatpush1.msra.mxu0 0.0
        %504 = vmatprep.subr.mxu0 0.0
        %505 = vmatpush1.msra.mxu0 0.0
        %506 = vmatprep.subr.mxu0 0.0
        %507 = vmatpush1.msra.mxu0 0.0
        %508 = vmatprep.mubr.f32.mxu0 0.0
        %509 = vmatmul.mubr.f32.gmra.mrb[0].mxu0 %v397
        %v510 = vpop.f32.mrb[0].mxu0
        %v511 = vadd.f32 0.0, %v510
        %v512 = vpop.f32.mrb[0].mxu0
        %513 = vmatprep.mubr.f32.mxu0 0.0
        %514 = vmatmul.mubr.f32.gmra.mrb[0].mxu0 %v400
        %v515 = vpop.f32.mrb[0].mxu0
        %v516 = vadd.f32 0.0, %v515
        %v517 = vpop.f32.mrb[0].mxu0
        %518 = vmatprep.mubr.f32.mxu0 0.0
        %519 = vmatmul.mubr.f32.gmra.mrb[0].mxu0 %v403
        %v520 = vpop.f32.mrb[0].mxu0
        %v521 = vadd.f32 0.0, %v520
        %v522 = vpop.f32.mrb[0].mxu0
        %523 = vmatprep.mubr.f32.mxu0 0.0
        %524 = vmatmul.mubr.f32.gmra.mrb[0].mxu0 %v406
        %v525 = vpop.f32.mrb[0].mxu0
        %v526 = vadd.f32 0.0, %v525
        %v527 = vpop.f32.mrb[0].mxu0
        %528 = vmatprep.mubr.f32.mxu0 0.0
        %529 = vmatmul.mubr.f32.gmra.mrb[0].mxu0 %v409
        %v530 = vpop.f32.mrb[0].mxu0
        %v531 = vadd.f32 0.0, %v530
        %v532 = vpop.f32.mrb[0].mxu0
        %533 = vmatprep.mubr.f32.mxu0 0.0
        %534 = vmatmul.mubr.f32.gmra.mrb[0].mxu0 %v412
        %v535 = vpop.f32.mrb[0].mxu0
        %v536 = vadd.f32 0.0, %v535
        %v537 = vpop.f32.mrb[0].mxu0
        %538 = vmatprep.mubr.f32.mxu0 0.0
        %539 = vmatmul.mubr.f32.gmra.mrb[0].mxu0 %v415
        %v540 = vpop.f32.mrb[0].mxu0
        %v541 = vadd.f32 0.0, %v540
        %v542 = vpop.f32.mrb[0].mxu0
        %543 = vmatprep.mubr.f32.mxu0 0.0
        %544 = vmatmul.mubr.f32.gmra.mrb[0].mxu0 %v418
        %v545 = vpop.f32.mrb[0].mxu0
        %v546 = vadd.f32 0.0, %v545
        %v547 = vpop.f32.mrb[0].mxu0
        %548 = vmatprep.mubr.f32.mxu0 0.0
        %549 = vmatmul.mubr.f32.gmra.mrb[0].mxu0 %v421
        %v550 = vpop.f32.mrb[0].mxu0
        %v551 = vadd.f32 0.0, %v550
        %v552 = vpop.f32.mrb[0].mxu0
        %553 = vmatprep.mubr.f32.mxu0 0.0
        %554 = vmatmul.mubr.f32.gmra.mrb[0].mxu0 %v424
        %v555 = vpop.f32.mrb[0].mxu0
        %v556 = vadd.f32 0.0, %v555
        %v557 = vpop.f32.mrb[0].mxu0
        %558 = vmatprep.mubr.f32.mxu0 0.0
        %559 = vmatmul.mubr.f32.gmra.mrb[0].mxu0 %v427
        %v560 = vpop.f32.mrb[0].mxu0
        %v561 = vadd.f32 0.0, %v560
        %v562 = vpop.f32.mrb[0].mxu0
        %563 = vmatprep.mubr.f32.mxu0 0.0
        %564 = vmatmul.mubr.f32.gmra.mrb[0].mxu0 %v430
        %v565 = vpop.f32.mrb[0].mxu0
        %v566 = vadd.f32 0.0, %v565
        %v567 = vpop.f32.mrb[0].mxu0
        %568 = vmatprep.mubr.f32.mxu0 0.0
        %569 = vmatmul.mubr.f32.gmra.mrb[0].mxu0 %v433
        %v570 = vpop.f32.mrb[0].mxu0
        %v571 = vadd.f32 0.0, %v570
        %v572 = vpop.f32.mrb[0].mxu0
        %573 = vmatprep.mubr.f32.mxu0 0.0
        %574 = vmatmul.mubr.f32.gmra.mrb[0].mxu0 %v436
        %v575 = vpop.f32.mrb[0].mxu0
        %v576 = vadd.f32 0.0, %v575
        %v577 = vpop.f32.mrb[0].mxu0
        %578 = vmatprep.mubr.f32.mxu0 0.0
        %579 = vmatmul.mubr.f32.gmra.mrb[0].mxu0 %v439
        %v580 = vpop.f32.mrb[0].mxu0
        %v581 = vadd.f32 0.0, %v580
        %v582 = vpop.f32.mrb[0].mxu0
        %583 = vmatprep.mubr.f32.mxu0 0.0
        %584 = vmatmul.mubr.f32.gmra.mrb[0].mxu0 %v442
        %v585 = vpop.f32.mrb[0].mxu0
        %v586 = vadd.f32 0.0, %v585
        %v587 = vpop.f32.mrb[0].mxu0
        %588 = vdwg.mxu0
        %589 = vxpose.xlu0.b32.start [1/16] %v356, 128
        %590 = vxpose.xlu0.b32.cont [2/16] 0.0, 128
        %591 = vxpose.xlu0.b32.cont [3/16] 0.0, 128
        %592 = vxpose.xlu0.b32.cont [4/16] 0.0, 128
        %593 = vxpose.xlu0.b32.cont [5/16] 0.0, 128
        %594 = vxpose.xlu0.b32.cont [6/16] 0.0, 128
        %595 = vxpose.xlu0.b32.cont [7/16] 0.0, 128
        %596 = vxpose.xlu0.b32.cont [8/16] 0.0, 128
        %597 = vxpose.xlu0.b32.cont [9/16] 0.0, 128
        %598 = vxpose.xlu0.b32.cont [10/16] 0.0, 128
        %599 = vxpose.xlu0.b32.cont [11/16] 0.0, 128
        %600 = vxpose.xlu0.b32.cont [12/16] 0.0, 128
        %601 = vxpose.xlu0.b32.cont [13/16] 0.0, 128
        %602 = vxpose.xlu0.b32.cont [14/16] 0.0, 128
        %603 = vxpose.xlu0.b32.cont [15/16] 0.0, 128
        %604 = vxpose.xlu0.b32.end [16/16] 0.0, 128
        %v605 = vpop.trf.xlu0
        %v606 = vpop.trf.xlu0
        %v607 = vpop.trf.xlu0
        %v608 = vpop.trf.xlu0
        %v609 = vpop.trf.xlu0
        %v610 = vpop.trf.xlu0
        %v611 = vpop.trf.xlu0
        %v612 = vpop.trf.xlu0
        %v613 = vpop.trf.xlu0
        %v614 = vpop.trf.xlu0
        %v615 = vpop.trf.xlu0
        %v616 = vpop.trf.xlu0
        %v617 = vpop.trf.xlu0
        %v618 = vpop.trf.xlu0
        %v619 = vpop.trf.xlu0
        %v620 = vpop.trf.xlu0
        %v622 = vsel %vm395, %v605, 0
        %v625 = vsel %vm395, %v606, 0
        %v628 = vsel %vm395, %v607, 0
        %v631 = vsel %vm395, %v608, 0
        %v634 = vsel %vm395, %v609, 0
        %v637 = vsel %vm395, %v610, 0
        %v640 = vsel %vm395, %v611, 0
        %v643 = vsel %vm395, %v612, 0
        %v646 = vsel %vm395, %v613, 0
        %v649 = vsel %vm395, %v614, 0
        %v652 = vsel %vm395, %v615, 0
        %v655 = vsel %vm395, %v616, 0
        %v658 = vsel %vm395, %v617, 0
        %v661 = vsel %vm395, %v618, 0
        %v664 = vsel %vm395, %v619, 0
        %v667 = vsel %vm395, %v620, 0
        %669 = vmatprep.subr.mxu0 0.0
        %670 = vmatpush1.msra.mxu0 %v352
        %671 = vmatprep.subr.mxu0 0.0
        %672 = vmatpush1.msra.mxu0 0.0
        %673 = vmatprep.subr.mxu0 0.0
        %674 = vmatpush1.msra.mxu0 0.0
        %675 = vmatprep.subr.mxu0 0.0
        %676 = vmatpush1.msra.mxu0 0.0
        %677 = vmatprep.subr.mxu0 0.0
        %678 = vmatpush1.msra.mxu0 0.0
        %679 = vmatprep.subr.mxu0 0.0
        %680 = vmatpush1.msra.mxu0 0.0
        %681 = vmatprep.subr.mxu0 0.0
        %682 = vmatpush1.msra.mxu0 0.0
        %683 = vmatprep.subr.mxu0 0.0
        %684 = vmatpush1.msra.mxu0 0.0
        %685 = vmatprep.subr.mxu0 0.0
        %686 = vmatpush1.msra.mxu0 0.0
        %687 = vmatprep.subr.mxu0 0.0
        %688 = vmatpush1.msra.mxu0 0.0
        %689 = vmatprep.subr.mxu0 0.0
        %690 = vmatpush1.msra.mxu0 0.0
        %691 = vmatprep.subr.mxu0 0.0
        %692 = vmatpush1.msra.mxu0 0.0
        %693 = vmatprep.subr.mxu0 0.0
        %694 = vmatpush1.msra.mxu0 0.0
        %695 = vmatprep.subr.mxu0 0.0
        %696 = vmatpush1.msra.mxu0 0.0
        %697 = vmatprep.subr.mxu0 0.0
        %698 = vmatpush1.msra.mxu0 0.0
        %699 = vmatprep.subr.mxu0 0.0
        %700 = vmatpush1.msra.mxu0 0.0
        %701 = vmatprep.subr.mxu0 0.0
        %702 = vmatpush1.msra.mxu0 0.0
        %703 = vmatprep.subr.mxu0 0.0
        %704 = vmatpush1.msra.mxu0 0.0
        %705 = vmatprep.subr.mxu0 0.0
        %706 = vmatpush1.msra.mxu0 0.0
        %707 = vmatprep.subr.mxu0 0.0
        %708 = vmatpush1.msra.mxu0 0.0
        %709 = vmatprep.subr.mxu0 0.0
        %710 = vmatpush1.msra.mxu0 0.0
        %711 = vmatprep.subr.mxu0 0.0
        %712 = vmatpush1.msra.mxu0 0.0
        %713 = vmatprep.subr.mxu0 0.0
        %714 = vmatpush1.msra.mxu0 0.0
        %715 = vmatprep.subr.mxu0 0.0
        %716 = vmatpush1.msra.mxu0 0.0
        %717 = vmatprep.subr.mxu0 0.0
        %718 = vmatpush1.msra.mxu0 0.0
        %719 = vmatprep.subr.mxu0 0.0
        %720 = vmatpush1.msra.mxu0 0.0
        %721 = vmatprep.subr.mxu0 0.0
        %722 = vmatpush1.msra.mxu0 0.0
        %723 = vmatprep.subr.mxu0 0.0
        %724 = vmatpush1.msra.mxu0 0.0
        %725 = vmatprep.subr.mxu0 0.0
        %726 = vmatpush1.msra.mxu0 0.0
        %727 = vmatprep.subr.mxu0 0.0
        %728 = vmatpush1.msra.mxu0 0.0
        %729 = vmatprep.subr.mxu0 0.0
        %730 = vmatpush1.msra.mxu0 0.0
        %731 = vmatprep.subr.mxu0 0.0
        %732 = vmatpush1.msra.mxu0 0.0
        %733 = vmatprep.mubr.f32.mxu0 0.0
        %734 = vmatmul.mubr.f32.gmra.mrb[0].mxu0 %v622
        %v735 = vpop.f32.mrb[0].mxu0
        %v736 = vadd.f32 0.0, %v735
        %v737 = vpop.f32.mrb[0].mxu0
        %738 = vmatprep.mubr.f32.mxu0 0.0
        %739 = vmatmul.mubr.f32.gmra.mrb[0].mxu0 %v625
        %v740 = vpop.f32.mrb[0].mxu0
        %v741 = vadd.f32 0.0, %v740
        %v742 = vpop.f32.mrb[0].mxu0
        %743 = vmatprep.mubr.f32.mxu0 0.0
        %744 = vmatmul.mubr.f32.gmra.mrb[0].mxu0 %v628
        %v745 = vpop.f32.mrb[0].mxu0
        %v746 = vadd.f32 0.0, %v745
        %v747 = vpop.f32.mrb[0].mxu0
        %748 = vmatprep.mubr.f32.mxu0 0.0
        %749 = vmatmul.mubr.f32.gmra.mrb[0].mxu0 %v631
        %v750 = vpop.f32.mrb[0].mxu0
        %v751 = vadd.f32 0.0, %v750
        %v752 = vpop.f32.mrb[0].mxu0
        %753 = vmatprep.mubr.f32.mxu0 0.0
        %754 = vmatmul.mubr.f32.gmra.mrb[0].mxu0 %v634
        %v755 = vpop.f32.mrb[0].mxu0
        %v756 = vadd.f32 0.0, %v755
        %v757 = vpop.f32.mrb[0].mxu0
        %758 = vmatprep.mubr.f32.mxu0 0.0
        %759 = vmatmul.mubr.f32.gmra.mrb[0].mxu0 %v637
        %v760 = vpop.f32.mrb[0].mxu0
        %v761 = vadd.f32 0.0, %v760
        %v762 = vpop.f32.mrb[0].mxu0
        %763 = vmatprep.mubr.f32.mxu0 0.0
        %764 = vmatmul.mubr.f32.gmra.mrb[0].mxu0 %v640
        %v765 = vpop.f32.mrb[0].mxu0
        %v766 = vadd.f32 0.0, %v765
        %v767 = vpop.f32.mrb[0].mxu0
        %768 = vmatprep.mubr.f32.mxu0 0.0
        %769 = vmatmul.mubr.f32.gmra.mrb[0].mxu0 %v643
        %v770 = vpop.f32.mrb[0].mxu0
        %v771 = vadd.f32 0.0, %v770
        %v772 = vpop.f32.mrb[0].mxu0
        %773 = vmatprep.mubr.f32.mxu0 0.0
        %774 = vmatmul.mubr.f32.gmra.mrb[0].mxu0 %v646
        %v775 = vpop.f32.mrb[0].mxu0
        %v776 = vadd.f32 0.0, %v775
        %v777 = vpop.f32.mrb[0].mxu0
        %778 = vmatprep.mubr.f32.mxu0 0.0
        %779 = vmatmul.mubr.f32.gmra.mrb[0].mxu0 %v649
        %v780 = vpop.f32.mrb[0].mxu0
        %v781 = vadd.f32 0.0, %v780
        %v782 = vpop.f32.mrb[0].mxu0
        %783 = vmatprep.mubr.f32.mxu0 0.0
        %784 = vmatmul.mubr.f32.gmra.mrb[0].mxu0 %v652
        %v785 = vpop.f32.mrb[0].mxu0
        %v786 = vadd.f32 0.0, %v785
        %v787 = vpop.f32.mrb[0].mxu0
        %788 = vmatprep.mubr.f32.mxu0 0.0
        %789 = vmatmul.mubr.f32.gmra.mrb[0].mxu0 %v655
        %v790 = vpop.f32.mrb[0].mxu0
        %v791 = vadd.f32 0.0, %v790
        %v792 = vpop.f32.mrb[0].mxu0
        %793 = vmatprep.mubr.f32.mxu0 0.0
        %794 = vmatmul.mubr.f32.gmra.mrb[0].mxu0 %v658
        %v795 = vpop.f32.mrb[0].mxu0
        %v796 = vadd.f32 0.0, %v795
        %v797 = vpop.f32.mrb[0].mxu0
        %798 = vmatprep.mubr.f32.mxu0 0.0
        %799 = vmatmul.mubr.f32.gmra.mrb[0].mxu0 %v661
        %v800 = vpop.f32.mrb[0].mxu0
        %v801 = vadd.f32 0.0, %v800
        %v802 = vpop.f32.mrb[0].mxu0
        %803 = vmatprep.mubr.f32.mxu0 0.0
        %804 = vmatmul.mubr.f32.gmra.mrb[0].mxu0 %v664
        %v805 = vpop.f32.mrb[0].mxu0
        %v806 = vadd.f32 0.0, %v805
        %v807 = vpop.f32.mrb[0].mxu0
        %808 = vmatprep.mubr.f32.mxu0 0.0
        %809 = vmatmul.mubr.f32.gmra.mrb[0].mxu0 %v667
        %v810 = vpop.f32.mrb[0].mxu0
        %v811 = vadd.f32 0.0, %v810
        %v812 = vpop.f32.mrb[0].mxu0
        %813 = vdwg.mxu0
        %814 = vxpose.xlu0.b32.start [1/16] %v357, 128
        %815 = vxpose.xlu0.b32.cont [2/16] 0.0, 128
        %816 = vxpose.xlu0.b32.cont [3/16] 0.0, 128
        %817 = vxpose.xlu0.b32.cont [4/16] 0.0, 128
        %818 = vxpose.xlu0.b32.cont [5/16] 0.0, 128
        %819 = vxpose.xlu0.b32.cont [6/16] 0.0, 128
        %820 = vxpose.xlu0.b32.cont [7/16] 0.0, 128
        %821 = vxpose.xlu0.b32.cont [8/16] 0.0, 128
        %822 = vxpose.xlu0.b32.cont [9/16] 0.0, 128
        %823 = vxpose.xlu0.b32.cont [10/16] 0.0, 128
        %824 = vxpose.xlu0.b32.cont [11/16] 0.0, 128
        %825 = vxpose.xlu0.b32.cont [12/16] 0.0, 128
        %826 = vxpose.xlu0.b32.cont [13/16] 0.0, 128
        %827 = vxpose.xlu0.b32.cont [14/16] 0.0, 128
        %828 = vxpose.xlu0.b32.cont [15/16] 0.0, 128
        %829 = vxpose.xlu0.b32.end [16/16] 0.0, 128
        %v830 = vpop.trf.xlu0
        %v831 = vpop.trf.xlu0
        %v832 = vpop.trf.xlu0
        %v833 = vpop.trf.xlu0
        %v834 = vpop.trf.xlu0
        %v835 = vpop.trf.xlu0
        %v836 = vpop.trf.xlu0
        %v837 = vpop.trf.xlu0
        %v838 = vpop.trf.xlu0
        %v839 = vpop.trf.xlu0
        %v840 = vpop.trf.xlu0
        %v841 = vpop.trf.xlu0
        %v842 = vpop.trf.xlu0
        %v843 = vpop.trf.xlu0
        %v844 = vpop.trf.xlu0
        %v845 = vpop.trf.xlu0
        %v847 = vsel %vm395, %v830, 0
        %v850 = vsel %vm395, %v831, 0
        %v853 = vsel %vm395, %v832, 0
        %v856 = vsel %vm395, %v833, 0
        %v859 = vsel %vm395, %v834, 0
        %v862 = vsel %vm395, %v835, 0
        %v865 = vsel %vm395, %v836, 0
        %v868 = vsel %vm395, %v837, 0
        %v871 = vsel %vm395, %v838, 0
        %v874 = vsel %vm395, %v839, 0
        %v877 = vsel %vm395, %v840, 0
        %v880 = vsel %vm395, %v841, 0
        %v883 = vsel %vm395, %v842, 0
        %v886 = vsel %vm395, %v843, 0
        %v889 = vsel %vm395, %v844, 0
        %v892 = vsel %vm395, %v845, 0
        %894 = vmatprep.subr.mxu0 0.0
        %895 = vmatpush1.msra.mxu0 %v353
        %896 = vmatprep.subr.mxu0 0.0
        %897 = vmatpush1.msra.mxu0 0.0
        %898 = vmatprep.subr.mxu0 0.0
        %899 = vmatpush1.msra.mxu0 0.0
        %900 = vmatprep.subr.mxu0 0.0
        %901 = vmatpush1.msra.mxu0 0.0
        %902 = vmatprep.subr.mxu0 0.0
        %903 = vmatpush1.msra.mxu0 0.0
        %904 = vmatprep.subr.mxu0 0.0
        %905 = vmatpush1.msra.mxu0 0.0
        %906 = vmatprep.subr.mxu0 0.0
        %907 = vmatpush1.msra.mxu0 0.0
        %908 = vmatprep.subr.mxu0 0.0
        %909 = vmatpush1.msra.mxu0 0.0
        %910 = vmatprep.subr.mxu0 0.0
        %911 = vmatpush1.msra.mxu0 0.0
        %912 = vmatprep.subr.mxu0 0.0
        %913 = vmatpush1.msra.mxu0 0.0
        %914 = vmatprep.subr.mxu0 0.0
        %915 = vmatpush1.msra.mxu0 0.0
        %916 = vmatprep.subr.mxu0 0.0
        %917 = vmatpush1.msra.mxu0 0.0
        %918 = vmatprep.subr.mxu0 0.0
        %919 = vmatpush1.msra.mxu0 0.0
        %920 = vmatprep.subr.mxu0 0.0
        %921 = vmatpush1.msra.mxu0 0.0
        %922 = vmatprep.subr.mxu0 0.0
        %923 = vmatpush1.msra.mxu0 0.0
        %924 = vmatprep.subr.mxu0 0.0
        %925 = vmatpush1.msra.mxu0 0.0
        %926 = vmatprep.subr.mxu0 0.0
        %927 = vmatpush1.msra.mxu0 0.0
        %928 = vmatprep.subr.mxu0 0.0
        %929 = vmatpush1.msra.mxu0 0.0
        %930 = vmatprep.subr.mxu0 0.0
        %931 = vmatpush1.msra.mxu0 0.0
        %932 = vmatprep.subr.mxu0 0.0
        %933 = vmatpush1.msra.mxu0 0.0
        %934 = vmatprep.subr.mxu0 0.0
        %935 = vmatpush1.msra.mxu0 0.0
        %936 = vmatprep.subr.mxu0 0.0
        %937 = vmatpush1.msra.mxu0 0.0
        %938 = vmatprep.subr.mxu0 0.0
        %939 = vmatpush1.msra.mxu0 0.0
        %940 = vmatprep.subr.mxu0 0.0
        %941 = vmatpush1.msra.mxu0 0.0
        %942 = vmatprep.subr.mxu0 0.0
        %943 = vmatpush1.msra.mxu0 0.0
        %944 = vmatprep.subr.mxu0 0.0
        %945 = vmatpush1.msra.mxu0 0.0
        %946 = vmatprep.subr.mxu0 0.0
        %947 = vmatpush1.msra.mxu0 0.0
        %948 = vmatprep.subr.mxu0 0.0
        %949 = vmatpush1.msra.mxu0 0.0
        %950 = vmatprep.subr.mxu0 0.0
        %951 = vmatpush1.msra.mxu0 0.0
        %952 = vmatprep.subr.mxu0 0.0
        %953 = vmatpush1.msra.mxu0 0.0
        %954 = vmatprep.subr.mxu0 0.0
        %955 = vmatpush1.msra.mxu0 0.0
        %956 = vmatprep.subr.mxu0 0.0
        %957 = vmatpush1.msra.mxu0 0.0
        %958 = vmatprep.mubr.f32.mxu0 0.0
        %959 = vmatmul.mubr.f32.gmra.mrb[0].mxu0 %v847
        %v960 = vpop.f32.mrb[0].mxu0
        %v961 = vadd.f32 0.0, %v960
        %v962 = vpop.f32.mrb[0].mxu0
        %963 = vmatprep.mubr.f32.mxu0 0.0
        %964 = vmatmul.mubr.f32.gmra.mrb[0].mxu0 %v850
        %v965 = vpop.f32.mrb[0].mxu0
        %v966 = vadd.f32 0.0, %v965
        %v967 = vpop.f32.mrb[0].mxu0
        %968 = vmatprep.mubr.f32.mxu0 0.0
        %969 = vmatmul.mubr.f32.gmra.mrb[0].mxu0 %v853
        %v970 = vpop.f32.mrb[0].mxu0
        %v971 = vadd.f32 0.0, %v970
        %v972 = vpop.f32.mrb[0].mxu0
        %973 = vmatprep.mubr.f32.mxu0 0.0
        %974 = vmatmul.mubr.f32.gmra.mrb[0].mxu0 %v856
        %v975 = vpop.f32.mrb[0].mxu0
        %v976 = vadd.f32 0.0, %v975
        %v977 = vpop.f32.mrb[0].mxu0
        %978 = vmatprep.mubr.f32.mxu0 0.0
        %979 = vmatmul.mubr.f32.gmra.mrb[0].mxu0 %v859
        %v980 = vpop.f32.mrb[0].mxu0
        %v981 = vadd.f32 0.0, %v980
        %v982 = vpop.f32.mrb[0].mxu0
        %983 = vmatprep.mubr.f32.mxu0 0.0
        %984 = vmatmul.mubr.f32.gmra.mrb[0].mxu0 %v862
        %v985 = vpop.f32.mrb[0].mxu0
        %v986 = vadd.f32 0.0, %v985
        %v987 = vpop.f32.mrb[0].mxu0
        %988 = vmatprep.mubr.f32.mxu0 0.0
        %989 = vmatmul.mubr.f32.gmra.mrb[0].mxu0 %v865
        %v990 = vpop.f32.mrb[0].mxu0
        %v991 = vadd.f32 0.0, %v990
        %v992 = vpop.f32.mrb[0].mxu0
        %993 = vmatprep.mubr.f32.mxu0 0.0
        %994 = vmatmul.mubr.f32.gmra.mrb[0].mxu0 %v868
        %v995 = vpop.f32.mrb[0].mxu0
        %v996 = vadd.f32 0.0, %v995
        %v997 = vpop.f32.mrb[0].mxu0
        %998 = vmatprep.mubr.f32.mxu0 0.0
        %999 = vmatmul.mubr.f32.gmra.mrb[0].mxu0 %v871
        %v1000 = vpop.f32.mrb[0].mxu0
        %v1001 = vadd.f32 0.0, %v1000
        %v1002 = vpop.f32.mrb[0].mxu0
        %1003 = vmatprep.mubr.f32.mxu0 0.0
        %1004 = vmatmul.mubr.f32.gmra.mrb[0].mxu0 %v874
        %v1005 = vpop.f32.mrb[0].mxu0
        %v1006 = vadd.f32 0.0, %v1005
        %v1007 = vpop.f32.mrb[0].mxu0
        %1008 = vmatprep.mubr.f32.mxu0 0.0
        %1009 = vmatmul.mubr.f32.gmra.mrb[0].mxu0 %v877
        %v1010 = vpop.f32.mrb[0].mxu0
        %v1011 = vadd.f32 0.0, %v1010
        %v1012 = vpop.f32.mrb[0].mxu0
        %1013 = vmatprep.mubr.f32.mxu0 0.0
        %1014 = vmatmul.mubr.f32.gmra.mrb[0].mxu0 %v880
        %v1015 = vpop.f32.mrb[0].mxu0
        %v1016 = vadd.f32 0.0, %v1015
        %v1017 = vpop.f32.mrb[0].mxu0
        %1018 = vmatprep.mubr.f32.mxu0 0.0
        %1019 = vmatmul.mubr.f32.gmra.mrb[0].mxu0 %v883
        %v1020 = vpop.f32.mrb[0].mxu0
        %v1021 = vadd.f32 0.0, %v1020
        %v1022 = vpop.f32.mrb[0].mxu0
        %1023 = vmatprep.mubr.f32.mxu0 0.0
        %1024 = vmatmul.mubr.f32.gmra.mrb[0].mxu0 %v886
        %v1025 = vpop.f32.mrb[0].mxu0
        %v1026 = vadd.f32 0.0, %v1025
        %v1027 = vpop.f32.mrb[0].mxu0
        %1028 = vmatprep.mubr.f32.mxu0 0.0
        %1029 = vmatmul.mubr.f32.gmra.mrb[0].mxu0 %v889
        %v1030 = vpop.f32.mrb[0].mxu0
        %v1031 = vadd.f32 0.0, %v1030
        %v1032 = vpop.f32.mrb[0].mxu0
        %1033 = vmatprep.mubr.f32.mxu0 0.0
        %1034 = vmatmul.mubr.f32.gmra.mrb[0].mxu0 %v892
        %v1035 = vpop.f32.mrb[0].mxu0
        %v1036 = vadd.f32 0.0, %v1035
        %v1037 = vpop.f32.mrb[0].mxu0
        %1038 = vdwg.mxu0
        %1039 = vxpose.xlu0.b32.start [1/16] %v358, 128
        %1040 = vxpose.xlu0.b32.cont [2/16] 0.0, 128
        %1041 = vxpose.xlu0.b32.cont [3/16] 0.0, 128
        %1042 = vxpose.xlu0.b32.cont [4/16] 0.0, 128
        %1043 = vxpose.xlu0.b32.cont [5/16] 0.0, 128
        %1044 = vxpose.xlu0.b32.cont [6/16] 0.0, 128
        %1045 = vxpose.xlu0.b32.cont [7/16] 0.0, 128
        %1046 = vxpose.xlu0.b32.cont [8/16] 0.0, 128
        %1047 = vxpose.xlu0.b32.cont [9/16] 0.0, 128
        %1048 = vxpose.xlu0.b32.cont [10/16] 0.0, 128
        %1049 = vxpose.xlu0.b32.cont [11/16] 0.0, 128
        %1050 = vxpose.xlu0.b32.cont [12/16] 0.0, 128
        %1051 = vxpose.xlu0.b32.cont [13/16] 0.0, 128
        %1052 = vxpose.xlu0.b32.cont [14/16] 0.0, 128
        %1053 = vxpose.xlu0.b32.cont [15/16] 0.0, 128
        %1054 = vxpose.xlu0.b32.end [16/16] 0.0, 128
        %v1055 = vpop.trf.xlu0
        %v1056 = vpop.trf.xlu0
        %v1057 = vpop.trf.xlu0
        %v1058 = vpop.trf.xlu0
        %v1059 = vpop.trf.xlu0
        %v1060 = vpop.trf.xlu0
        %v1061 = vpop.trf.xlu0
        %v1062 = vpop.trf.xlu0
        %v1063 = vpop.trf.xlu0
        %v1064 = vpop.trf.xlu0
        %v1065 = vpop.trf.xlu0
        %v1066 = vpop.trf.xlu0
        %v1067 = vpop.trf.xlu0
        %v1068 = vpop.trf.xlu0
        %v1069 = vpop.trf.xlu0
        %v1070 = vpop.trf.xlu0
        %v1072 = vsel %vm395, %v1055, 0
        %v1075 = vsel %vm395, %v1056, 0
        %v1078 = vsel %vm395, %v1057, 0
        %v1081 = vsel %vm395, %v1058, 0
        %v1084 = vsel %vm395, %v1059, 0
        %v1087 = vsel %vm395, %v1060, 0
        %v1090 = vsel %vm395, %v1061, 0
        %v1093 = vsel %vm395, %v1062, 0
        %v1096 = vsel %vm395, %v1063, 0
        %v1099 = vsel %vm395, %v1064, 0
        %v1102 = vsel %vm395, %v1065, 0
        %v1105 = vsel %vm395, %v1066, 0
        %v1108 = vsel %vm395, %v1067, 0
        %v1111 = vsel %vm395, %v1068, 0
        %v1114 = vsel %vm395, %v1069, 0
        %v1117 = vsel %vm395, %v1070, 0
        %1119 = vmatprep.subr.mxu0 0.0
        %1120 = vmatpush1.msra.mxu0 %v354
        %1121 = vmatprep.subr.mxu0 0.0
        %1122 = vmatpush1.msra.mxu0 0.0
        %1123 = vmatprep.subr.mxu0 0.0
        %1124 = vmatpush1.msra.mxu0 0.0
        %1125 = vmatprep.subr.mxu0 0.0
        %1126 = vmatpush1.msra.mxu0 0.0
        %1127 = vmatprep.subr.mxu0 0.0
        %1128 = vmatpush1.msra.mxu0 0.0
        %1129 = vmatprep.subr.mxu0 0.0
        %1130 = vmatpush1.msra.mxu0 0.0
        %1131 = vmatprep.subr.mxu0 0.0
        %1132 = vmatpush1.msra.mxu0 0.0
        %1133 = vmatprep.subr.mxu0 0.0
        %1134 = vmatpush1.msra.mxu0 0.0
        %1135 = vmatprep.subr.mxu0 0.0
        %1136 = vmatpush1.msra.mxu0 0.0
        %1137 = vmatprep.subr.mxu0 0.0
        %1138 = vmatpush1.msra.mxu0 0.0
        %1139 = vmatprep.subr.mxu0 0.0
        %1140 = vmatpush1.msra.mxu0 0.0
        %1141 = vmatprep.subr.mxu0 0.0
        %1142 = vmatpush1.msra.mxu0 0.0
        %1143 = vmatprep.subr.mxu0 0.0
        %1144 = vmatpush1.msra.mxu0 0.0
        %1145 = vmatprep.subr.mxu0 0.0
        %1146 = vmatpush1.msra.mxu0 0.0
        %1147 = vmatprep.subr.mxu0 0.0
        %1148 = vmatpush1.msra.mxu0 0.0
        %1149 = vmatprep.subr.mxu0 0.0
        %1150 = vmatpush1.msra.mxu0 0.0
        %1151 = vmatprep.subr.mxu0 0.0
        %1152 = vmatpush1.msra.mxu0 0.0
        %1153 = vmatprep.subr.mxu0 0.0
        %1154 = vmatpush1.msra.mxu0 0.0
        %1155 = vmatprep.subr.mxu0 0.0
        %1156 = vmatpush1.msra.mxu0 0.0
        %1157 = vmatprep.subr.mxu0 0.0
        %1158 = vmatpush1.msra.mxu0 0.0
        %1159 = vmatprep.subr.mxu0 0.0
        %1160 = vmatpush1.msra.mxu0 0.0
        %1161 = vmatprep.subr.mxu0 0.0
        %1162 = vmatpush1.msra.mxu0 0.0
        %1163 = vmatprep.subr.mxu0 0.0
        %1164 = vmatpush1.msra.mxu0 0.0
        %1165 = vmatprep.subr.mxu0 0.0
        %1166 = vmatpush1.msra.mxu0 0.0
        %1167 = vmatprep.subr.mxu0 0.0
        %1168 = vmatpush1.msra.mxu0 0.0
        %1169 = vmatprep.subr.mxu0 0.0
        %1170 = vmatpush1.msra.mxu0 0.0
        %1171 = vmatprep.subr.mxu0 0.0
        %1172 = vmatpush1.msra.mxu0 0.0
        %1173 = vmatprep.subr.mxu0 0.0
        %1174 = vmatpush1.msra.mxu0 0.0
        %1175 = vmatprep.subr.mxu0 0.0
        %1176 = vmatpush1.msra.mxu0 0.0
        %1177 = vmatprep.subr.mxu0 0.0
        %1178 = vmatpush1.msra.mxu0 0.0
        %1179 = vmatprep.subr.mxu0 0.0
        %1180 = vmatpush1.msra.mxu0 0.0
        %1181 = vmatprep.subr.mxu0 0.0
        %1182 = vmatpush1.msra.mxu0 0.0
        %1183 = vmatprep.mubr.f32.mxu0 0.0
        %1184 = vmatmul.mubr.f32.gmra.mrb[0].mxu0 %v1072
        %v1185 = vpop.f32.mrb[0].mxu0
        %v1186 = vadd.f32 0.0, %v1185
        %v1187 = vpop.f32.mrb[0].mxu0
        %1188 = vmatprep.mubr.f32.mxu0 0.0
        %1189 = vmatmul.mubr.f32.gmra.mrb[0].mxu0 %v1075
        %v1190 = vpop.f32.mrb[0].mxu0
        %v1191 = vadd.f32 0.0, %v1190
        %v1192 = vpop.f32.mrb[0].mxu0
        %1193 = vmatprep.mubr.f32.mxu0 0.0
        %1194 = vmatmul.mubr.f32.gmra.mrb[0].mxu0 %v1078
        %v1195 = vpop.f32.mrb[0].mxu0
        %v1196 = vadd.f32 0.0, %v1195
        %v1197 = vpop.f32.mrb[0].mxu0
        %1198 = vmatprep.mubr.f32.mxu0 0.0
        %1199 = vmatmul.mubr.f32.gmra.mrb[0].mxu0 %v1081
        %v1200 = vpop.f32.mrb[0].mxu0
        %v1201 = vadd.f32 0.0, %v1200
        %v1202 = vpop.f32.mrb[0].mxu0
        %1203 = vmatprep.mubr.f32.mxu0 0.0
        %1204 = vmatmul.mubr.f32.gmra.mrb[0].mxu0 %v1084
        %v1205 = vpop.f32.mrb[0].mxu0
        %v1206 = vadd.f32 0.0, %v1205
        %v1207 = vpop.f32.mrb[0].mxu0
        %1208 = vmatprep.mubr.f32.mxu0 0.0
        %1209 = vmatmul.mubr.f32.gmra.mrb[0].mxu0 %v1087
        %v1210 = vpop.f32.mrb[0].mxu0
        %v1211 = vadd.f32 0.0, %v1210
        %v1212 = vpop.f32.mrb[0].mxu0
        %1213 = vmatprep.mubr.f32.mxu0 0.0
        %1214 = vmatmul.mubr.f32.gmra.mrb[0].mxu0 %v1090
        %v1215 = vpop.f32.mrb[0].mxu0
        %v1216 = vadd.f32 0.0, %v1215
        %v1217 = vpop.f32.mrb[0].mxu0
        %1218 = vmatprep.mubr.f32.mxu0 0.0
        %1219 = vmatmul.mubr.f32.gmra.mrb[0].mxu0 %v1093
        %v1220 = vpop.f32.mrb[0].mxu0
        %v1221 = vadd.f32 0.0, %v1220
        %v1222 = vpop.f32.mrb[0].mxu0
        %1223 = vmatprep.mubr.f32.mxu0 0.0
        %1224 = vmatmul.mubr.f32.gmra.mrb[0].mxu0 %v1096
        %v1225 = vpop.f32.mrb[0].mxu0
        %v1226 = vadd.f32 0.0, %v1225
        %v1227 = vpop.f32.mrb[0].mxu0
        %1228 = vmatprep.mubr.f32.mxu0 0.0
        %1229 = vmatmul.mubr.f32.gmra.mrb[0].mxu0 %v1099
        %v1230 = vpop.f32.mrb[0].mxu0
        %v1231 = vadd.f32 0.0, %v1230
        %v1232 = vpop.f32.mrb[0].mxu0
        %1233 = vmatprep.mubr.f32.mxu0 0.0
        %1234 = vmatmul.mubr.f32.gmra.mrb[0].mxu0 %v1102
        %v1235 = vpop.f32.mrb[0].mxu0
        %v1236 = vadd.f32 0.0, %v1235
        %v1237 = vpop.f32.mrb[0].mxu0
        %1238 = vmatprep.mubr.f32.mxu0 0.0
        %1239 = vmatmul.mubr.f32.gmra.mrb[0].mxu0 %v1105
        %v1240 = vpop.f32.mrb[0].mxu0
        %v1241 = vadd.f32 0.0, %v1240
        %v1242 = vpop.f32.mrb[0].mxu0
        %1243 = vmatprep.mubr.f32.mxu0 0.0
        %1244 = vmatmul.mubr.f32.gmra.mrb[0].mxu0 %v1108
        %v1245 = vpop.f32.mrb[0].mxu0
        %v1246 = vadd.f32 0.0, %v1245
        %v1247 = vpop.f32.mrb[0].mxu0
        %1248 = vmatprep.mubr.f32.mxu0 0.0
        %1249 = vmatmul.mubr.f32.gmra.mrb[0].mxu0 %v1111
        %v1250 = vpop.f32.mrb[0].mxu0
        %v1251 = vadd.f32 0.0, %v1250
        %v1252 = vpop.f32.mrb[0].mxu0
        %1253 = vmatprep.mubr.f32.mxu0 0.0
        %1254 = vmatmul.mubr.f32.gmra.mrb[0].mxu0 %v1114
        %v1255 = vpop.f32.mrb[0].mxu0
        %v1256 = vadd.f32 0.0, %v1255
        %v1257 = vpop.f32.mrb[0].mxu0
        %1258 = vmatprep.mubr.f32.mxu0 0.0
        %1259 = vmatmul.mubr.f32.gmra.mrb[0].mxu0 %v1117
        %v1260 = vpop.f32.mrb[0].mxu0
        %v1261 = vadd.f32 0.0, %v1260
        %v1262 = vpop.f32.mrb[0].mxu0
        %1263 = vdwg.mxu0
        %s1264 = smul.u32 %s32, 128
        %v1265 = vlaneseq
        %v1266 = vshrl.u32 %v1265, 7
        %v1267 = vadd.s32 %v1266, 8
        %v1268 = vadd.s32 %v1266, 16
        %v1269 = vadd.s32 %v1266, 24
        %v1270 = vadd.s32 %v1266, 32
        %v1271 = vadd.s32 %v1266, 40
        %v1272 = vadd.s32 %v1266, 48
        %v1273 = vadd.s32 %v1266, 56
        %v1274 = vadd.s32 %v1266, 64
        %v1275 = vadd.s32 %v1266, 72
        %v1276 = vadd.s32 %v1266, 80
        %v1277 = vadd.s32 %v1266, 88
        %v1278 = vadd.s32 %v1266, 96
        %v1279 = vadd.s32 %v1266, 104
        %v1280 = vadd.s32 %v1266, 112
        %v1281 = vadd.s32 %v1266, 120
        %v1282 = vstv %s1264
        %v1283 = vadd.s32 %v1282, %v1266
        %v1284 = vadd.s32 %v1282, %v1267
        %v1285 = vadd.s32 %v1282, %v1268
        %v1286 = vadd.s32 %v1282, %v1269
        %v1287 = vadd.s32 %v1282, %v1270
        %v1288 = vadd.s32 %v1282, %v1271
        %v1289 = vadd.s32 %v1282, %v1272
        %v1290 = vadd.s32 %v1282, %v1273
        %v1291 = vadd.s32 %v1282, %v1274
        %v1292 = vadd.s32 %v1282, %v1275
        %v1293 = vadd.s32 %v1282, %v1276
        %v1294 = vadd.s32 %v1282, %v1277
        %v1295 = vadd.s32 %v1282, %v1278
        %v1296 = vadd.s32 %v1282, %v1279
        %v1297 = vadd.s32 %v1282, %v1280
        %v1298 = vadd.s32 %v1282, %v1281
        %vm1299 = vcmp.lt.s32.totalorder %v1283, 8
        %vm1300 = vcmp.lt.s32.totalorder %v1284, 8
        %vm1301 = vcmp.lt.s32.totalorder %v1285, 8
        %vm1302 = vcmp.lt.s32.totalorder %v1286, 8
        %vm1303 = vcmp.lt.s32.totalorder %v1287, 8
        %vm1304 = vcmp.lt.s32.totalorder %v1288, 8
        %vm1305 = vcmp.lt.s32.totalorder %v1289, 8
        %vm1306 = vcmp.lt.s32.totalorder %v1290, 8
        %vm1307 = vcmp.lt.s32.totalorder %v1291, 8
        %vm1308 = vcmp.lt.s32.totalorder %v1292, 8
        %vm1309 = vcmp.lt.s32.totalorder %v1293, 8
        %vm1310 = vcmp.lt.s32.totalorder %v1294, 8
        %vm1311 = vcmp.lt.s32.totalorder %v1295, 8
        %vm1312 = vcmp.lt.s32.totalorder %v1296, 8
        %vm1313 = vcmp.lt.s32.totalorder %v1297, 8
        %vm1314 = vcmp.lt.s32.totalorder %v1298, 8
        %v1315 = vsel %vm1299, 1, 0
        %v1316 = vsel %vm1300, 1, 0
        %v1317 = vsel %vm1301, 1, 0
        %v1318 = vsel %vm1302, 1, 0
        %v1319 = vsel %vm1303, 1, 0
        %v1320 = vsel %vm1304, 1, 0
        %v1321 = vsel %vm1305, 1, 0
        %v1322 = vsel %vm1306, 1, 0
        %v1323 = vsel %vm1307, 1, 0
        %v1324 = vsel %vm1308, 1, 0
        %v1325 = vsel %vm1309, 1, 0
        %v1326 = vsel %vm1310, 1, 0
        %v1327 = vsel %vm1311, 1, 0
        %v1328 = vsel %vm1312, 1, 0
        %v1329 = vsel %vm1313, 1, 0
        %v1330 = vsel %vm1314, 1, 0
        %vm1331 = vcmp.eq.s32.totalorder %v1315, 1
        %vm1332 = vcmp.eq.s32.totalorder %v1316, 1
        %vm1333 = vcmp.eq.s32.totalorder %v1317, 1
        %vm1334 = vcmp.eq.s32.totalorder %v1318, 1
        %vm1335 = vcmp.eq.s32.totalorder %v1319, 1
        %vm1336 = vcmp.eq.s32.totalorder %v1320, 1
        %vm1337 = vcmp.eq.s32.totalorder %v1321, 1
        %vm1338 = vcmp.eq.s32.totalorder %v1322, 1
        %vm1339 = vcmp.eq.s32.totalorder %v1323, 1
        %vm1340 = vcmp.eq.s32.totalorder %v1324, 1
        %vm1341 = vcmp.eq.s32.totalorder %v1325, 1
        %vm1342 = vcmp.eq.s32.totalorder %v1326, 1
        %vm1343 = vcmp.eq.s32.totalorder %v1327, 1
        %vm1344 = vcmp.eq.s32.totalorder %v1328, 1
        %vm1345 = vcmp.eq.s32.totalorder %v1329, 1
        %vm1346 = vcmp.eq.s32.totalorder %v1330, 1
        %v1347 = vsel %vm1331, %v511, -1e+30
        %v1348 = vsel %vm1332, %v516, -1e+30
        %v1349 = vsel %vm1333, %v521, -1e+30
        %v1350 = vsel %vm1334, %v526, -1e+30
        %v1351 = vsel %vm1335, %v531, -1e+30
        %v1352 = vsel %vm1336, %v536, -1e+30
        %v1353 = vsel %vm1337, %v541, -1e+30
        %v1354 = vsel %vm1338, %v546, -1e+30
        %v1355 = vsel %vm1339, %v551, -1e+30
        %v1356 = vsel %vm1340, %v556, -1e+30
        %v1357 = vsel %vm1341, %v561, -1e+30
        %v1358 = vsel %vm1342, %v566, -1e+30
        %v1359 = vsel %vm1343, %v571, -1e+30
        %v1360 = vsel %vm1344, %v576, -1e+30
        %v1361 = vsel %vm1345, %v581, -1e+30
        %v1362 = vsel %vm1346, %v586, -1e+30
        %v1363 = vsel %vm1331, %v736, -1e+30
        %v1364 = vsel %vm1332, %v741, -1e+30
        %v1365 = vsel %vm1333, %v746, -1e+30
        %v1366 = vsel %vm1334, %v751, -1e+30
        %v1367 = vsel %vm1335, %v756, -1e+30
        %v1368 = vsel %vm1336, %v761, -1e+30
        %v1369 = vsel %vm1337, %v766, -1e+30
        %v1370 = vsel %vm1338, %v771, -1e+30
        %v1371 = vsel %vm1339, %v776, -1e+30
        %v1372 = vsel %vm1340, %v781, -1e+30
        %v1373 = vsel %vm1341, %v786, -1e+30
        %v1374 = vsel %vm1342, %v791, -1e+30
        %v1375 = vsel %vm1343, %v796, -1e+30
        %v1376 = vsel %vm1344, %v801, -1e+30
        %v1377 = vsel %vm1345, %v806, -1e+30
        %v1378 = vsel %vm1346, %v811, -1e+30
        %v1379 = vsel %vm1331, %v961, -1e+30
        %v1380 = vsel %vm1332, %v966, -1e+30
        %v1381 = vsel %vm1333, %v971, -1e+30
        %v1382 = vsel %vm1334, %v976, -1e+30
        %v1383 = vsel %vm1335, %v981, -1e+30
        %v1384 = vsel %vm1336, %v986, -1e+30
        %v1385 = vsel %vm1337, %v991, -1e+30
        %v1386 = vsel %vm1338, %v996, -1e+30
        %v1387 = vsel %vm1339, %v1001, -1e+30
        %v1388 = vsel %vm1340, %v1006, -1e+30
        %v1389 = vsel %vm1341, %v1011, -1e+30
        %v1390 = vsel %vm1342, %v1016, -1e+30
        %v1391 = vsel %vm1343, %v1021, -1e+30
        %v1392 = vsel %vm1344, %v1026, -1e+30
        %v1393 = vsel %vm1345, %v1031, -1e+30
        %v1394 = vsel %vm1346, %v1036, -1e+30
        %v1395 = vsel %vm1331, %v1186, -1e+30
        %v1396 = vsel %vm1332, %v1191, -1e+30
        %v1397 = vsel %vm1333, %v1196, -1e+30
        %v1398 = vsel %vm1334, %v1201, -1e+30
        %v1399 = vsel %vm1335, %v1206, -1e+30
        %v1400 = vsel %vm1336, %v1211, -1e+30
        %v1401 = vsel %vm1337, %v1216, -1e+30
        %v1402 = vsel %vm1338, %v1221, -1e+30
        %v1403 = vsel %vm1339, %v1226, -1e+30
        %v1404 = vsel %vm1340, %v1231, -1e+30
        %v1405 = vsel %vm1341, %v1236, -1e+30
        %v1406 = vsel %vm1342, %v1241, -1e+30
        %v1407 = vsel %vm1343, %v1246, -1e+30
        %v1408 = vsel %vm1344, %v1251, -1e+30
        %v1409 = vsel %vm1345, %v1256, -1e+30
        %v1410 = vsel %vm1346, %v1261, -1e+30
        %v1411 = vld [vmem:[#allocation3] sm:$0x1]
        %v1412 = vld [vmem:[#allocation3 + $0x1] sm:$0x1]
        %v1413 = vld [vmem:[#allocation3 + $0x2] sm:$0x1]
        %v1414 = vld [vmem:[#allocation3 + $0x3] sm:$0x1]
        %v1415 = vmax.f32 %v1347, %v1348
        %v1416 = vmax.f32 %v1415, %v1349
        %v1417 = vmax.f32 %v1416, %v1350
        %v1418 = vmax.f32 %v1417, %v1351
        %v1419 = vmax.f32 %v1418, %v1352
        %v1420 = vmax.f32 %v1419, %v1353
        %v1421 = vmax.f32 %v1420, %v1354
        %v1422 = vmax.f32 %v1421, %v1355
        %v1423 = vmax.f32 %v1422, %v1356
        %v1424 = vmax.f32 %v1423, %v1357
        %v1425 = vmax.f32 %v1424, %v1358
        %v1426 = vmax.f32 %v1425, %v1359
        %v1427 = vmax.f32 %v1426, %v1360
        %v1428 = vmax.f32 %v1427, %v1361
        %v1429 = vmax.f32 %v1428, %v1362
        %v1430 = vrot.slane %v1429, 4
        %v1431 = vmax.f32 %v1429, %v1430
        %v1432 = vrot.slane %v1431, 2
        %v1433 = vmax.f32 %v1431, %v1432
        %v1434 = vrot.slane %v1433, 1
        %v1435 = vmax.f32 %v1433, %v1434
        %v1436 = vmax.f32 %v1363, %v1364
        %v1437 = vmax.f32 %v1436, %v1365
        %v1438 = vmax.f32 %v1437, %v1366
        %v1439 = vmax.f32 %v1438, %v1367
        %v1440 = vmax.f32 %v1439, %v1368
        %v1441 = vmax.f32 %v1440, %v1369
        %v1442 = vmax.f32 %v1441, %v1370
        %v1443 = vmax.f32 %v1442, %v1371
        %v1444 = vmax.f32 %v1443, %v1372
        %v1445 = vmax.f32 %v1444, %v1373
        %v1446 = vmax.f32 %v1445, %v1374
        %v1447 = vmax.f32 %v1446, %v1375
        %v1448 = vmax.f32 %v1447, %v1376
        %v1449 = vmax.f32 %v1448, %v1377
        %v1450 = vmax.f32 %v1449, %v1378
        %v1451 = vrot.slane %v1450, 4
        %v1452 = vmax.f32 %v1450, %v1451
        %v1453 = vrot.slane %v1452, 2
        %v1454 = vmax.f32 %v1452, %v1453
        %v1455 = vrot.slane %v1454, 1
        %v1456 = vmax.f32 %v1454, %v1455
        %v1457 = vmax.f32 %v1379, %v1380
        %v1458 = vmax.f32 %v1457, %v1381
        %v1459 = vmax.f32 %v1458, %v1382
        %v1460 = vmax.f32 %v1459, %v1383
        %v1461 = vmax.f32 %v1460, %v1384
        %v1462 = vmax.f32 %v1461, %v1385
        %v1463 = vmax.f32 %v1462, %v1386
        %v1464 = vmax.f32 %v1463, %v1387
        %v1465 = vmax.f32 %v1464, %v1388
        %v1466 = vmax.f32 %v1465, %v1389
        %v1467 = vmax.f32 %v1466, %v1390
        %v1468 = vmax.f32 %v1467, %v1391
        %v1469 = vmax.f32 %v1468, %v1392
        %v1470 = vmax.f32 %v1469, %v1393
        %v1471 = vmax.f32 %v1470, %v1394
        %v1472 = vrot.slane %v1471, 4
        %v1473 = vmax.f32 %v1471, %v1472
        %v1474 = vrot.slane %v1473, 2
        %v1475 = vmax.f32 %v1473, %v1474
        %v1476 = vrot.slane %v1475, 1
        %v1477 = vmax.f32 %v1475, %v1476
        %v1478 = vmax.f32 %v1395, %v1396
        %v1479 = vmax.f32 %v1478, %v1397
        %v1480 = vmax.f32 %v1479, %v1398
        %v1481 = vmax.f32 %v1480, %v1399
        %v1482 = vmax.f32 %v1481, %v1400
        %v1483 = vmax.f32 %v1482, %v1401
        %v1484 = vmax.f32 %v1483, %v1402
        %v1485 = vmax.f32 %v1484, %v1403
        %v1486 = vmax.f32 %v1485, %v1404
        %v1487 = vmax.f32 %v1486, %v1405
        %v1488 = vmax.f32 %v1487, %v1406
        %v1489 = vmax.f32 %v1488, %v1407
        %v1490 = vmax.f32 %v1489, %v1408
        %v1491 = vmax.f32 %v1490, %v1409
        %v1492 = vmax.f32 %v1491, %v1410
        %v1493 = vrot.slane %v1492, 4
        %v1494 = vmax.f32 %v1492, %v1493
        %v1495 = vrot.slane %v1494, 2
        %v1496 = vmax.f32 %v1494, %v1495
        %v1497 = vrot.slane %v1496, 1
        %v1498 = vmax.f32 %v1496, %v1497
        %v1499 = vmax.f32 %v1411, %v1435
        %v1500 = vmax.f32 %v1412, %v1456
        %v1501 = vmax.f32 %v1413, %v1477
        %v1502 = vmax.f32 %v1414, %v1498
        %v1503 = vsub.f32 %v1411, %v1499
        %v1504 = vsub.f32 %v1412, %v1500
        %v1505 = vsub.f32 %v1413, %v1501
        %v1506 = vsub.f32 %v1414, %v1502
        %v1507 = vmul.f32 %v1503, 1.442695
        %v1508 = vpow.pop %v1507
        %v1509 = vmul.f32 %v1504, 1.442695
        %v1510 = vpow.pop %v1509
        %v1511 = vmul.f32 %v1505, 1.442695
        %v1512 = vpow.pop %v1511
        %v1513 = vmul.f32 %v1506, 1.442695
        %v1514 = vpow.pop %v1513
        %v1519 = vlaneseq
        %v1520 = vshrl.u32 %v1519, 7
        %v1521 = vsub.s32 0, %v1520
        %v1522 = vrot.slane %v1499, %v1521
        %v1523 = vlaneseq
        %v1524 = vshrl.u32 %v1523, 7
        %v1525 = vsub.s32 0, %v1524
        %v1526 = vrot.slane %v1500, %v1525
        %v1527 = vlaneseq
        %v1528 = vshrl.u32 %v1527, 7
        %v1529 = vsub.s32 0, %v1528
        %v1530 = vrot.slane %v1501, %v1529
        %v1531 = vlaneseq
        %v1532 = vshrl.u32 %v1531, 7
        %v1533 = vsub.s32 0, %v1532
        %v1534 = vrot.slane %v1502, %v1533
        %v1539 = vsub.f32 %v1347, %v1522
        %v1540 = vsub.f32 %v1348, %v1522
        %v1541 = vsub.f32 %v1349, %v1522
        %v1542 = vsub.f32 %v1350, %v1522
        %v1543 = vsub.f32 %v1351, %v1522
        %v1544 = vsub.f32 %v1352, %v1522
        %v1545 = vsub.f32 %v1353, %v1522
        %v1546 = vsub.f32 %v1354, %v1522
        %v1547 = vsub.f32 %v1355, %v1522
        %v1548 = vsub.f32 %v1356, %v1522
        %v1549 = vsub.f32 %v1357, %v1522
        %v1550 = vsub.f32 %v1358, %v1522
        %v1551 = vsub.f32 %v1359, %v1522
        %v1552 = vsub.f32 %v1360, %v1522
        %v1553 = vsub.f32 %v1361, %v1522
        %v1554 = vsub.f32 %v1362, %v1522
        %v1555 = vsub.f32 %v1363, %v1526
        %v1556 = vsub.f32 %v1364, %v1526
        %v1557 = vsub.f32 %v1365, %v1526
        %v1558 = vsub.f32 %v1366, %v1526
        %v1559 = vsub.f32 %v1367, %v1526
        %v1560 = vsub.f32 %v1368, %v1526
        %v1561 = vsub.f32 %v1369, %v1526
        %v1562 = vsub.f32 %v1370, %v1526
        %v1563 = vsub.f32 %v1371, %v1526
        %v1564 = vsub.f32 %v1372, %v1526
        %v1565 = vsub.f32 %v1373, %v1526
        %v1566 = vsub.f32 %v1374, %v1526
        %v1567 = vsub.f32 %v1375, %v1526
        %v1568 = vsub.f32 %v1376, %v1526
        %v1569 = vsub.f32 %v1377, %v1526
        %v1570 = vsub.f32 %v1378, %v1526
        %v1571 = vsub.f32 %v1379, %v1530
        %v1572 = vsub.f32 %v1380, %v1530
        %v1573 = vsub.f32 %v1381, %v1530
        %v1574 = vsub.f32 %v1382, %v1530
        %v1575 = vsub.f32 %v1383, %v1530
        %v1576 = vsub.f32 %v1384, %v1530
        %v1577 = vsub.f32 %v1385, %v1530
        %v1578 = vsub.f32 %v1386, %v1530
        %v1579 = vsub.f32 %v1387, %v1530
        %v1580 = vsub.f32 %v1388, %v1530
        %v1581 = vsub.f32 %v1389, %v1530
        %v1582 = vsub.f32 %v1390, %v1530
        %v1583 = vsub.f32 %v1391, %v1530
        %v1584 = vsub.f32 %v1392, %v1530
        %v1585 = vsub.f32 %v1393, %v1530
        %v1586 = vsub.f32 %v1394, %v1530
        %v1587 = vsub.f32 %v1395, %v1534
        %v1588 = vsub.f32 %v1396, %v1534
        %v1589 = vsub.f32 %v1397, %v1534
        %v1590 = vsub.f32 %v1398, %v1534
        %v1591 = vsub.f32 %v1399, %v1534
        %v1592 = vsub.f32 %v1400, %v1534
        %v1593 = vsub.f32 %v1401, %v1534
        %v1594 = vsub.f32 %v1402, %v1534
        %v1595 = vsub.f32 %v1403, %v1534
        %v1596 = vsub.f32 %v1404, %v1534
        %v1597 = vsub.f32 %v1405, %v1534
        %v1598 = vsub.f32 %v1406, %v1534
        %v1599 = vsub.f32 %v1407, %v1534
        %v1600 = vsub.f32 %v1408, %v1534
        %v1601 = vsub.f32 %v1409, %v1534
        %v1602 = vsub.f32 %v1410, %v1534
        %v1603 = vmul.f32 %v1539, 1.442695
        %v1604 = vpow.pop %v1603
        %v1605 = vmul.f32 %v1540, 1.442695
        %v1606 = vpow.pop %v1605
        %v1607 = vmul.f32 %v1541, 1.442695
        %v1608 = vpow.pop %v1607
        %v1609 = vmul.f32 %v1542, 1.442695
        %v1610 = vpow.pop %v1609
        %v1611 = vmul.f32 %v1543, 1.442695
        %v1612 = vpow.pop %v1611
        %v1613 = vmul.f32 %v1544, 1.442695
        %v1614 = vpow.pop %v1613
        %v1615 = vmul.f32 %v1545, 1.442695
        %v1616 = vpow.pop %v1615
        %v1617 = vmul.f32 %v1546, 1.442695
        %v1618 = vpow.pop %v1617
        %v1619 = vmul.f32 %v1547, 1.442695
        %v1620 = vpow.pop %v1619
        %v1621 = vmul.f32 %v1548, 1.442695
        %v1622 = vpow.pop %v1621
        %v1623 = vmul.f32 %v1549, 1.442695
        %v1624 = vpow.pop %v1623
        %v1625 = vmul.f32 %v1550, 1.442695
        %v1626 = vpow.pop %v1625
        %v1627 = vmul.f32 %v1551, 1.442695
        %v1628 = vpow.pop %v1627
        %v1629 = vmul.f32 %v1552, 1.442695
        %v1630 = vpow.pop %v1629
        %v1631 = vmul.f32 %v1553, 1.442695
        %v1632 = vpow.pop %v1631
        %v1633 = vmul.f32 %v1554, 1.442695
        %v1634 = vpow.pop %v1633
        %v1635 = vmul.f32 %v1555, 1.442695
        %v1636 = vpow.pop %v1635
        %v1637 = vmul.f32 %v1556, 1.442695
        %v1638 = vpow.pop %v1637
        %v1639 = vmul.f32 %v1557, 1.442695
        %v1640 = vpow.pop %v1639
        %v1641 = vmul.f32 %v1558, 1.442695
        %v1642 = vpow.pop %v1641
        %v1643 = vmul.f32 %v1559, 1.442695
        %v1644 = vpow.pop %v1643
        %v1645 = vmul.f32 %v1560, 1.442695
        %v1646 = vpow.pop %v1645
        %v1647 = vmul.f32 %v1561, 1.442695
        %v1648 = vpow.pop %v1647
        %v1649 = vmul.f32 %v1562, 1.442695
        %v1650 = vpow.pop %v1649
        %v1651 = vmul.f32 %v1563, 1.442695
        %v1652 = vpow.pop %v1651
        %v1653 = vmul.f32 %v1564, 1.442695
        %v1654 = vpow.pop %v1653
        %v1655 = vmul.f32 %v1565, 1.442695
        %v1656 = vpow.pop %v1655
        %v1657 = vmul.f32 %v1566, 1.442695
        %v1658 = vpow.pop %v1657
        %v1659 = vmul.f32 %v1567, 1.442695
        %v1660 = vpow.pop %v1659
        %v1661 = vmul.f32 %v1568, 1.442695
        %v1662 = vpow.pop %v1661
        %v1663 = vmul.f32 %v1569, 1.442695
        %v1664 = vpow.pop %v1663
        %v1665 = vmul.f32 %v1570, 1.442695
        %v1666 = vpow.pop %v1665
        %v1667 = vmul.f32 %v1571, 1.442695
        %v1668 = vpow.pop %v1667
        %v1669 = vmul.f32 %v1572, 1.442695
        %v1670 = vpow.pop %v1669
        %v1671 = vmul.f32 %v1573, 1.442695
        %v1672 = vpow.pop %v1671
        %v1673 = vmul.f32 %v1574, 1.442695
        %v1674 = vpow.pop %v1673
        %v1675 = vmul.f32 %v1575, 1.442695
        %v1676 = vpow.pop %v1675
        %v1677 = vmul.f32 %v1576, 1.442695
        %v1678 = vpow.pop %v1677
        %v1679 = vmul.f32 %v1577, 1.442695
        %v1680 = vpow.pop %v1679
        %v1681 = vmul.f32 %v1578, 1.442695
        %v1682 = vpow.pop %v1681
        %v1683 = vmul.f32 %v1579, 1.442695
        %v1684 = vpow.pop %v1683
        %v1685 = vmul.f32 %v1580, 1.442695
        %v1686 = vpow.pop %v1685
        %v1687 = vmul.f32 %v1581, 1.442695
        %v1688 = vpow.pop %v1687
        %v1689 = vmul.f32 %v1582, 1.442695
        %v1690 = vpow.pop %v1689
        %v1691 = vmul.f32 %v1583, 1.442695
        %v1692 = vpow.pop %v1691
        %v1693 = vmul.f32 %v1584, 1.442695
        %v1694 = vpow.pop %v1693
        %v1695 = vmul.f32 %v1585, 1.442695
        %v1696 = vpow.pop %v1695
        %v1697 = vmul.f32 %v1586, 1.442695
        %v1698 = vpow.pop %v1697
        %v1699 = vmul.f32 %v1587, 1.442695
        %v1700 = vpow.pop %v1699
        %v1701 = vmul.f32 %v1588, 1.442695
        %v1702 = vpow.pop %v1701
        %v1703 = vmul.f32 %v1589, 1.442695
        %v1704 = vpow.pop %v1703
        %v1705 = vmul.f32 %v1590, 1.442695
        %v1706 = vpow.pop %v1705
        %v1707 = vmul.f32 %v1591, 1.442695
        %v1708 = vpow.pop %v1707
        %v1709 = vmul.f32 %v1592, 1.442695
        %v1710 = vpow.pop %v1709
        %v1711 = vmul.f32 %v1593, 1.442695
        %v1712 = vpow.pop %v1711
        %v1713 = vmul.f32 %v1594, 1.442695
        %v1714 = vpow.pop %v1713
        %v1715 = vmul.f32 %v1595, 1.442695
        %v1716 = vpow.pop %v1715
        %v1717 = vmul.f32 %v1596, 1.442695
        %v1718 = vpow.pop %v1717
        %v1719 = vmul.f32 %v1597, 1.442695
        %v1720 = vpow.pop %v1719
        %v1721 = vmul.f32 %v1598, 1.442695
        %v1722 = vpow.pop %v1721
        %v1723 = vmul.f32 %v1599, 1.442695
        %v1724 = vpow.pop %v1723
        %v1725 = vmul.f32 %v1600, 1.442695
        %v1726 = vpow.pop %v1725
        %v1727 = vmul.f32 %v1601, 1.442695
        %v1728 = vpow.pop %v1727
        %v1729 = vmul.f32 %v1602, 1.442695
        %v1730 = vpow.pop %v1729
        %v1731 = vld [vmem:[#allocation4] sm:$0x1]
        %v1732 = vld [vmem:[#allocation4 + $0x1] sm:$0x1]
        %v1733 = vld [vmem:[#allocation4 + $0x2] sm:$0x1]
        %v1734 = vld [vmem:[#allocation4 + $0x3] sm:$0x1]
        %v1735 = vmul.f32 %v1508, %v1731
        %v1736 = vmul.f32 %v1510, %v1732
        %v1737 = vmul.f32 %v1512, %v1733
        %v1738 = vmul.f32 %v1514, %v1734
        %v1739 = vadd.f32 %v1604, %v1606
        %v1740 = vadd.f32 %v1739, %v1608
        %v1741 = vadd.f32 %v1740, %v1610
        %v1742 = vadd.f32 %v1741, %v1612
        %v1743 = vadd.f32 %v1742, %v1614
        %v1744 = vadd.f32 %v1743, %v1616
        %v1745 = vadd.f32 %v1744, %v1618
        %v1746 = vadd.f32 %v1745, %v1620
        %v1747 = vadd.f32 %v1746, %v1622
        %v1748 = vadd.f32 %v1747, %v1624
        %v1749 = vadd.f32 %v1748, %v1626
        %v1750 = vadd.f32 %v1749, %v1628
        %v1751 = vadd.f32 %v1750, %v1630
        %v1752 = vadd.f32 %v1751, %v1632
        %v1753 = vadd.f32 %v1752, %v1634
        %v1754 = vrot.slane %v1753, 4
        %v1755 = vadd.f32 %v1753, %v1754
        %v1756 = vrot.slane %v1755, 2
        %v1757 = vadd.f32 %v1755, %v1756
        %v1758 = vrot.slane %v1757, 1
        %v1759 = vadd.f32 %v1757, %v1758
        %v1760 = vadd.f32 %v1636, %v1638
        %v1761 = vadd.f32 %v1760, %v1640
        %v1762 = vadd.f32 %v1761, %v1642
        %v1763 = vadd.f32 %v1762, %v1644
        %v1764 = vadd.f32 %v1763, %v1646
        %v1765 = vadd.f32 %v1764, %v1648
        %v1766 = vadd.f32 %v1765, %v1650
        %v1767 = vadd.f32 %v1766, %v1652
        %v1768 = vadd.f32 %v1767, %v1654
        %v1769 = vadd.f32 %v1768, %v1656
        %v1770 = vadd.f32 %v1769, %v1658
        %v1771 = vadd.f32 %v1770, %v1660
        %v1772 = vadd.f32 %v1771, %v1662
        %v1773 = vadd.f32 %v1772, %v1664
        %v1774 = vadd.f32 %v1773, %v1666
        %v1775 = vrot.slane %v1774, 4
        %v1776 = vadd.f32 %v1774, %v1775
        %v1777 = vrot.slane %v1776, 2
        %v1778 = vadd.f32 %v1776, %v1777
        %v1779 = vrot.slane %v1778, 1
        %v1780 = vadd.f32 %v1778, %v1779
        %v1781 = vadd.f32 %v1668, %v1670
        %v1782 = vadd.f32 %v1781, %v1672
        %v1783 = vadd.f32 %v1782, %v1674
        %v1784 = vadd.f32 %v1783, %v1676
        %v1785 = vadd.f32 %v1784, %v1678
        %v1786 = vadd.f32 %v1785, %v1680
        %v1787 = vadd.f32 %v1786, %v1682
        %v1788 = vadd.f32 %v1787, %v1684
        %v1789 = vadd.f32 %v1788, %v1686
        %v1790 = vadd.f32 %v1789, %v1688
        %v1791 = vadd.f32 %v1790, %v1690
        %v1792 = vadd.f32 %v1791, %v1692
        %v1793 = vadd.f32 %v1792, %v1694
        %v1794 = vadd.f32 %v1793, %v1696
        %v1795 = vadd.f32 %v1794, %v1698
        %v1796 = vrot.slane %v1795, 4
        %v1797 = vadd.f32 %v1795, %v1796
        %v1798 = vrot.slane %v1797, 2
        %v1799 = vadd.f32 %v1797, %v1798
        %v1800 = vrot.slane %v1799, 1
        %v1801 = vadd.f32 %v1799, %v1800
        %v1802 = vadd.f32 %v1700, %v1702
        %v1803 = vadd.f32 %v1802, %v1704
        %v1804 = vadd.f32 %v1803, %v1706
        %v1805 = vadd.f32 %v1804, %v1708
        %v1806 = vadd.f32 %v1805, %v1710
        %v1807 = vadd.f32 %v1806, %v1712
        %v1808 = vadd.f32 %v1807, %v1714
        %v1809 = vadd.f32 %v1808, %v1716
        %v1810 = vadd.f32 %v1809, %v1718
        %v1811 = vadd.f32 %v1810, %v1720
        %v1812 = vadd.f32 %v1811, %v1722
        %v1813 = vadd.f32 %v1812, %v1724
        %v1814 = vadd.f32 %v1813, %v1726
        %v1815 = vadd.f32 %v1814, %v1728
        %v1816 = vadd.f32 %v1815, %v1730
        %v1817 = vrot.slane %v1816, 4
        %v1818 = vadd.f32 %v1816, %v1817
        %v1819 = vrot.slane %v1818, 2
        %v1820 = vadd.f32 %v1818, %v1819
        %v1821 = vrot.slane %v1820, 1
        %v1822 = vadd.f32 %v1820, %v1821
        %v1823 = vadd.f32 %v1735, %v1759
        %v1824 = vadd.f32 %v1736, %v1780
        %v1825 = vadd.f32 %v1737, %v1801
        %v1826 = vadd.f32 %v1738, %v1822
        %1827 = vst [vmem:[#allocation4] sm:$0x1] %v1823
        %1828 = vst [vmem:[#allocation4 + $0x1] sm:$0x1] %v1824
        %1829 = vst [vmem:[#allocation4 + $0x2] sm:$0x1] %v1825
        %1830 = vst [vmem:[#allocation4 + $0x3] sm:$0x1] %v1826
        %1831 = vmatprep.subr.mxu0 0.0
        %1832 = vmatpush1.msra.mxu0 %v1604
        %1833 = vmatprep.subr.mxu0 0.0
        %1834 = vmatpush1.msra.mxu0 %v1606
        %1835 = vmatprep.subr.mxu0 0.0
        %1836 = vmatpush1.msra.mxu0 %v1608
        %1837 = vmatprep.subr.mxu0 0.0
        %1838 = vmatpush1.msra.mxu0 %v1610
        %1839 = vmatprep.subr.mxu0 0.0
        %1840 = vmatpush1.msra.mxu0 %v1612
        %1841 = vmatprep.subr.mxu0 0.0
        %1842 = vmatpush1.msra.mxu0 %v1614
        %1843 = vmatprep.subr.mxu0 0.0
        %1844 = vmatpush1.msra.mxu0 %v1616
        %1845 = vmatprep.subr.mxu0 0.0
        %1846 = vmatpush1.msra.mxu0 %v1618
        %1847 = vmatprep.subr.mxu0 0.0
        %1848 = vmatpush1.msra.mxu0 %v1620
        %1849 = vmatprep.subr.mxu0 0.0
        %1850 = vmatpush1.msra.mxu0 %v1622
        %1851 = vmatprep.subr.mxu0 0.0
        %1852 = vmatpush1.msra.mxu0 %v1624
        %1853 = vmatprep.subr.mxu0 0.0
        %1854 = vmatpush1.msra.mxu0 %v1626
        %1855 = vmatprep.subr.mxu0 0.0
        %1856 = vmatpush1.msra.mxu0 %v1628
        %1857 = vmatprep.subr.mxu0 0.0
        %1858 = vmatpush1.msra.mxu0 %v1630
        %1859 = vmatprep.subr.mxu0 0.0
        %1860 = vmatpush1.msra.mxu0 %v1632
        %1861 = vmatprep.subr.mxu0 0.0
        %1862 = vmatpush1.msra.mxu0 %v1634
        %1863 = vmatprep.subr.mxu0 0.0
        %1864 = vmatpush1.msra.mxu0 0.0
        %1865 = vmatprep.subr.mxu0 0.0
        %1866 = vmatpush1.msra.mxu0 0.0
        %1867 = vmatprep.subr.mxu0 0.0
        %1868 = vmatpush1.msra.mxu0 0.0
        %1869 = vmatprep.subr.mxu0 0.0
        %1870 = vmatpush1.msra.mxu0 0.0
        %1871 = vmatprep.subr.mxu0 0.0
        %1872 = vmatpush1.msra.mxu0 0.0
        %1873 = vmatprep.subr.mxu0 0.0
        %1874 = vmatpush1.msra.mxu0 0.0
        %1875 = vmatprep.subr.mxu0 0.0
        %1876 = vmatpush1.msra.mxu0 0.0
        %1877 = vmatprep.subr.mxu0 0.0
        %1878 = vmatpush1.msra.mxu0 0.0
        %1879 = vmatprep.subr.mxu0 0.0
        %1880 = vmatpush1.msra.mxu0 0.0
        %1881 = vmatprep.subr.mxu0 0.0
        %1882 = vmatpush1.msra.mxu0 0.0
        %1883 = vmatprep.subr.mxu0 0.0
        %1884 = vmatpush1.msra.mxu0 0.0
        %1885 = vmatprep.subr.mxu0 0.0
        %1886 = vmatpush1.msra.mxu0 0.0
        %1887 = vmatprep.subr.mxu0 0.0
        %1888 = vmatpush1.msra.mxu0 0.0
        %1889 = vmatprep.subr.mxu0 0.0
        %1890 = vmatpush1.msra.mxu0 0.0
        %1891 = vmatprep.subr.mxu0 0.0
        %1892 = vmatpush1.msra.mxu0 0.0
        %1893 = vmatprep.subr.mxu0 0.0
        %1894 = vmatpush1.msra.mxu0 0.0
        %1895 = vmatprep.mubr.f32.mxu0 0.0
        %1896 = vmatmul.mubr.f32.gmra.mrb[0].mxu0 %v359
        %v1897 = vpop.f32.mrb[0].mxu0
        %v1898 = vadd.f32 0.0, %v1897
        %v1899 = vpop.f32.mrb[0].mxu0
        %1900 = vdwg.mxu0
        %1901 = vmatprep.subr.mxu0 0.0
        %1902 = vmatpush1.msra.mxu0 %v1636
        %1903 = vmatprep.subr.mxu0 0.0
        %1904 = vmatpush1.msra.mxu0 %v1638
        %1905 = vmatprep.subr.mxu0 0.0
        %1906 = vmatpush1.msra.mxu0 %v1640
        %1907 = vmatprep.subr.mxu0 0.0
        %1908 = vmatpush1.msra.mxu0 %v1642
        %1909 = vmatprep.subr.mxu0 0.0
        %1910 = vmatpush1.msra.mxu0 %v1644
        %1911 = vmatprep.subr.mxu0 0.0
        %1912 = vmatpush1.msra.mxu0 %v1646
        %1913 = vmatprep.subr.mxu0 0.0
        %1914 = vmatpush1.msra.mxu0 %v1648
        %1915 = vmatprep.subr.mxu0 0.0
        %1916 = vmatpush1.msra.mxu0 %v1650
        %1917 = vmatprep.subr.mxu0 0.0
        %1918 = vmatpush1.msra.mxu0 %v1652
        %1919 = vmatprep.subr.mxu0 0.0
        %1920 = vmatpush1.msra.mxu0 %v1654
        %1921 = vmatprep.subr.mxu0 0.0
        %1922 = vmatpush1.msra.mxu0 %v1656
        %1923 = vmatprep.subr.mxu0 0.0
        %1924 = vmatpush1.msra.mxu0 %v1658
        %1925 = vmatprep.subr.mxu0 0.0
        %1926 = vmatpush1.msra.mxu0 %v1660
        %1927 = vmatprep.subr.mxu0 0.0
        %1928 = vmatpush1.msra.mxu0 %v1662
        %1929 = vmatprep.subr.mxu0 0.0
        %1930 = vmatpush1.msra.mxu0 %v1664
        %1931 = vmatprep.subr.mxu0 0.0
        %1932 = vmatpush1.msra.mxu0 %v1666
        %1933 = vmatprep.subr.mxu0 0.0
        %1934 = vmatpush1.msra.mxu0 0.0
        %1935 = vmatprep.subr.mxu0 0.0
        %1936 = vmatpush1.msra.mxu0 0.0
        %1937 = vmatprep.subr.mxu0 0.0
        %1938 = vmatpush1.msra.mxu0 0.0
        %1939 = vmatprep.subr.mxu0 0.0
        %1940 = vmatpush1.msra.mxu0 0.0
        %1941 = vmatprep.subr.mxu0 0.0
        %1942 = vmatpush1.msra.mxu0 0.0
        %1943 = vmatprep.subr.mxu0 0.0
        %1944 = vmatpush1.msra.mxu0 0.0
        %1945 = vmatprep.subr.mxu0 0.0
        %1946 = vmatpush1.msra.mxu0 0.0
        %1947 = vmatprep.subr.mxu0 0.0
        %1948 = vmatpush1.msra.mxu0 0.0
        %1949 = vmatprep.subr.mxu0 0.0
        %1950 = vmatpush1.msra.mxu0 0.0
        %1951 = vmatprep.subr.mxu0 0.0
        %1952 = vmatpush1.msra.mxu0 0.0
        %1953 = vmatprep.subr.mxu0 0.0
        %1954 = vmatpush1.msra.mxu0 0.0
        %1955 = vmatprep.subr.mxu0 0.0
        %1956 = vmatpush1.msra.mxu0 0.0
        %1957 = vmatprep.subr.mxu0 0.0
        %1958 = vmatpush1.msra.mxu0 0.0
        %1959 = vmatprep.subr.mxu0 0.0
        %1960 = vmatpush1.msra.mxu0 0.0
        %1961 = vmatprep.subr.mxu0 0.0
        %1962 = vmatpush1.msra.mxu0 0.0
        %1963 = vmatprep.subr.mxu0 0.0
        %1964 = vmatpush1.msra.mxu0 0.0
        %1965 = vmatprep.mubr.f32.mxu0 0.0
        %1966 = vmatmul.mubr.f32.gmra.mrb[0].mxu0 %v360
        %v1967 = vpop.f32.mrb[0].mxu0
        %v1968 = vadd.f32 0.0, %v1967
        %v1969 = vpop.f32.mrb[0].mxu0
        %1970 = vdwg.mxu0
        %1971 = vmatprep.subr.mxu0 0.0
        %1972 = vmatpush1.msra.mxu0 %v1668
        %1973 = vmatprep.subr.mxu0 0.0
        %1974 = vmatpush1.msra.mxu0 %v1670
        %1975 = vmatprep.subr.mxu0 0.0
        %1976 = vmatpush1.msra.mxu0 %v1672
        %1977 = vmatprep.subr.mxu0 0.0
        %1978 = vmatpush1.msra.mxu0 %v1674
        %1979 = vmatprep.subr.mxu0 0.0
        %1980 = vmatpush1.msra.mxu0 %v1676
        %1981 = vmatprep.subr.mxu0 0.0
        %1982 = vmatpush1.msra.mxu0 %v1678
        %1983 = vmatprep.subr.mxu0 0.0
        %1984 = vmatpush1.msra.mxu0 %v1680
        %1985 = vmatprep.subr.mxu0 0.0
        %1986 = vmatpush1.msra.mxu0 %v1682
        %1987 = vmatprep.subr.mxu0 0.0
        %1988 = vmatpush1.msra.mxu0 %v1684
        %1989 = vmatprep.subr.mxu0 0.0
        %1990 = vmatpush1.msra.mxu0 %v1686
        %1991 = vmatprep.subr.mxu0 0.0
        %1992 = vmatpush1.msra.mxu0 %v1688
        %1993 = vmatprep.subr.mxu0 0.0
        %1994 = vmatpush1.msra.mxu0 %v1690
        %1995 = vmatprep.subr.mxu0 0.0
        %1996 = vmatpush1.msra.mxu0 %v1692
        %1997 = vmatprep.subr.mxu0 0.0
        %1998 = vmatpush1.msra.mxu0 %v1694
        %1999 = vmatprep.subr.mxu0 0.0
        %2000 = vmatpush1.msra.mxu0 %v1696
        %2001 = vmatprep.subr.mxu0 0.0
        %2002 = vmatpush1.msra.mxu0 %v1698
        %2003 = vmatprep.subr.mxu0 0.0
        %2004 = vmatpush1.msra.mxu0 0.0
        %2005 = vmatprep.subr.mxu0 0.0
        %2006 = vmatpush1.msra.mxu0 0.0
        %2007 = vmatprep.subr.mxu0 0.0
        %2008 = vmatpush1.msra.mxu0 0.0
        %2009 = vmatprep.subr.mxu0 0.0
        %2010 = vmatpush1.msra.mxu0 0.0
        %2011 = vmatprep.subr.mxu0 0.0
        %2012 = vmatpush1.msra.mxu0 0.0
        %2013 = vmatprep.subr.mxu0 0.0
        %2014 = vmatpush1.msra.mxu0 0.0
        %2015 = vmatprep.subr.mxu0 0.0
        %2016 = vmatpush1.msra.mxu0 0.0
        %2017 = vmatprep.subr.mxu0 0.0
        %2018 = vmatpush1.msra.mxu0 0.0
        %2019 = vmatprep.subr.mxu0 0.0
        %2020 = vmatpush1.msra.mxu0 0.0
        %2021 = vmatprep.subr.mxu0 0.0
        %2022 = vmatpush1.msra.mxu0 0.0
        %2023 = vmatprep.subr.mxu0 0.0
        %2024 = vmatpush1.msra.mxu0 0.0
        %2025 = vmatprep.subr.mxu0 0.0
        %2026 = vmatpush1.msra.mxu0 0.0
        %2027 = vmatprep.subr.mxu0 0.0
        %2028 = vmatpush1.msra.mxu0 0.0
        %2029 = vmatprep.subr.mxu0 0.0
        %2030 = vmatpush1.msra.mxu0 0.0
        %2031 = vmatprep.subr.mxu0 0.0
        %2032 = vmatpush1.msra.mxu0 0.0
        %2033 = vmatprep.subr.mxu0 0.0
        %2034 = vmatpush1.msra.mxu0 0.0
        %2035 = vmatprep.mubr.f32.mxu0 0.0
        %2036 = vmatmul.mubr.f32.gmra.mrb[0].mxu0 %v361
        %v2037 = vpop.f32.mrb[0].mxu0
        %v2038 = vadd.f32 0.0, %v2037
        %v2039 = vpop.f32.mrb[0].mxu0
        %2040 = vdwg.mxu0
        %2041 = vmatprep.subr.mxu0 0.0
        %2042 = vmatpush1.msra.mxu0 %v1700
        %2043 = vmatprep.subr.mxu0 0.0
        %2044 = vmatpush1.msra.mxu0 %v1702
        %2045 = vmatprep.subr.mxu0 0.0
        %2046 = vmatpush1.msra.mxu0 %v1704
        %2047 = vmatprep.subr.mxu0 0.0
        %2048 = vmatpush1.msra.mxu0 %v1706
        %2049 = vmatprep.subr.mxu0 0.0
        %2050 = vmatpush1.msra.mxu0 %v1708
        %2051 = vmatprep.subr.mxu0 0.0
        %2052 = vmatpush1.msra.mxu0 %v1710
        %2053 = vmatprep.subr.mxu0 0.0
        %2054 = vmatpush1.msra.mxu0 %v1712
        %2055 = vmatprep.subr.mxu0 0.0
        %2056 = vmatpush1.msra.mxu0 %v1714
        %2057 = vmatprep.subr.mxu0 0.0
        %2058 = vmatpush1.msra.mxu0 %v1716
        %2059 = vmatprep.subr.mxu0 0.0
        %2060 = vmatpush1.msra.mxu0 %v1718
        %2061 = vmatprep.subr.mxu0 0.0
        %2062 = vmatpush1.msra.mxu0 %v1720
        %2063 = vmatprep.subr.mxu0 0.0
        %2064 = vmatpush1.msra.mxu0 %v1722
        %2065 = vmatprep.subr.mxu0 0.0
        %2066 = vmatpush1.msra.mxu0 %v1724
        %2067 = vmatprep.subr.mxu0 0.0
        %2068 = vmatpush1.msra.mxu0 %v1726
        %2069 = vmatprep.subr.mxu0 0.0
        %2070 = vmatpush1.msra.mxu0 %v1728
        %2071 = vmatprep.subr.mxu0 0.0
        %2072 = vmatpush1.msra.mxu0 %v1730
        %2073 = vmatprep.subr.mxu0 0.0
        %2074 = vmatpush1.msra.mxu0 0.0
        %2075 = vmatprep.subr.mxu0 0.0
        %2076 = vmatpush1.msra.mxu0 0.0
        %2077 = vmatprep.subr.mxu0 0.0
        %2078 = vmatpush1.msra.mxu0 0.0
        %2079 = vmatprep.subr.mxu0 0.0
        %2080 = vmatpush1.msra.mxu0 0.0
        %2081 = vmatprep.subr.mxu0 0.0
        %2082 = vmatpush1.msra.mxu0 0.0
        %2083 = vmatprep.subr.mxu0 0.0
        %2084 = vmatpush1.msra.mxu0 0.0
        %2085 = vmatprep.subr.mxu0 0.0
        %2086 = vmatpush1.msra.mxu0 0.0
        %2087 = vmatprep.subr.mxu0 0.0
        %2088 = vmatpush1.msra.mxu0 0.0
        %2089 = vmatprep.subr.mxu0 0.0
        %2090 = vmatpush1.msra.mxu0 0.0
        %2091 = vmatprep.subr.mxu0 0.0
        %2092 = vmatpush1.msra.mxu0 0.0
        %2093 = vmatprep.subr.mxu0 0.0
        %2094 = vmatpush1.msra.mxu0 0.0
        %2095 = vmatprep.subr.mxu0 0.0
        %2096 = vmatpush1.msra.mxu0 0.0
        %2097 = vmatprep.subr.mxu0 0.0
        %2098 = vmatpush1.msra.mxu0 0.0
        %2099 = vmatprep.subr.mxu0 0.0
        %2100 = vmatpush1.msra.mxu0 0.0
        %2101 = vmatprep.subr.mxu0 0.0
        %2102 = vmatpush1.msra.mxu0 0.0
        %2103 = vmatprep.subr.mxu0 0.0
        %2104 = vmatpush1.msra.mxu0 0.0
        %2105 = vmatprep.mubr.f32.mxu0 0.0
        %2106 = vmatmul.mubr.f32.gmra.mrb[0].mxu0 %v362
        %v2107 = vpop.f32.mrb[0].mxu0
        %v2108 = vadd.f32 0.0, %v2107
        %v2109 = vpop.f32.mrb[0].mxu0
        %2110 = vdwg.mxu0
        %v2111 = vld [vmem:[#allocation5] sm:$0xff]
        %v2112 = vld [vmem:[#allocation5 + $0x8] sm:$0xff]
        %v2113 = vld [vmem:[#allocation5 + $0x10] sm:$0xff]
        %v2114 = vld [vmem:[#allocation5 + $0x18] sm:$0xff]
        %v2119 = vlaneseq
        %v2120 = vshrl.u32 %v2119, 7
        %v2121 = vsub.s32 0, %v2120
        %v2122 = vrot.slane %v1508, %v2121
        %v2123 = vlaneseq
        %v2124 = vshrl.u32 %v2123, 7
        %v2125 = vsub.s32 0, %v2124
        %v2126 = vrot.slane %v1510, %v2125
        %v2127 = vlaneseq
        %v2128 = vshrl.u32 %v2127, 7
        %v2129 = vsub.s32 0, %v2128
        %v2130 = vrot.slane %v1512, %v2129
        %v2131 = vlaneseq
        %v2132 = vshrl.u32 %v2131, 7
        %v2133 = vsub.s32 0, %v2132
        %v2134 = vrot.slane %v1514, %v2133
        %v2139 = vmul.f32 %v2122, %v2111
        %v2140 = vmul.f32 %v2126, %v2112
        %v2141 = vmul.f32 %v2130, %v2113
        %v2142 = vmul.f32 %v2134, %v2114
        %v2143 = vadd.f32 %v2139, %v1898
        %v2144 = vadd.f32 %v2140, %v1968
        %v2145 = vadd.f32 %v2141, %v2038
        %v2146 = vadd.f32 %v2142, %v2108
        %2147 = vst [vmem:[#allocation5] sm:$0xff] %v2143
        %2148 = vst [vmem:[#allocation5 + $0x8] sm:$0xff] %v2144
        %2149 = vst [vmem:[#allocation5 + $0x10] sm:$0xff] %v2145
        %2150 = vst [vmem:[#allocation5 + $0x18] sm:$0xff] %v2146
        %2151 = vst [vmem:[#allocation3] sm:$0x1] %v1499
        %2152 = vst [vmem:[#allocation3 + $0x1] sm:$0x1] %v1500
        %2153 = vst [vmem:[#allocation3 + $0x2] sm:$0x1] %v1501
        %2154 = vst [vmem:[#allocation3 + $0x3] sm:$0x1] %v1502
        // Predicated region
        $region49: #{tpu_custom_call.1} parent=31 // pred_check
          %p2155 = pneg %p323
        $region50: #{tpu_custom_call.1} parent=31 // pred_check_branch
          %2157 = sbr.rel (%p2155) target = $region52
        $region51: #{tpu_custom_call.1} parent=31 // pred_region
          %v2158 = vld [vmem:[#allocation4] sm:$0x1]
          %v2159 = vld [vmem:[#allocation4 + $0x1] sm:$0x1]
          %v2160 = vld [vmem:[#allocation4 + $0x2] sm:$0x1]
          %v2161 = vld [vmem:[#allocation4 + $0x3] sm:$0x1]
          %v2162 = vrcp.pop %v2158
          %v2163 = vrcp.pop %v2159
          %v2164 = vrcp.pop %v2160
          %v2165 = vrcp.pop %v2161
          %v2166 = vmul.f32 %v2158, %v2162
          %v2167 = vmul.f32 %v2159, %v2163
          %v2168 = vmul.f32 %v2160, %v2164
          %v2169 = vmul.f32 %v2161, %v2165
          %v2170 = vsub.f32 2.0, %v2166
          %v2171 = vsub.f32 2.0, %v2167
          %v2172 = vsub.f32 2.0, %v2168
          %v2173 = vsub.f32 2.0, %v2169
          %v2174 = vmul.f32 %v2162, %v2170
          %v2175 = vmul.f32 %v2163, %v2171
          %v2176 = vmul.f32 %v2164, %v2172
          %v2177 = vmul.f32 %v2165, %v2173
          %v2178 = vld [vmem:[#allocation5] sm:$0xff]
          %v2179 = vld [vmem:[#allocation5 + $0x8] sm:$0xff]
          %v2180 = vld [vmem:[#allocation5 + $0x10] sm:$0xff]
          %v2181 = vld [vmem:[#allocation5 + $0x18] sm:$0xff]
          %v2186 = vlaneseq
          %v2187 = vshrl.u32 %v2186, 7
          %v2188 = vsub.s32 0, %v2187
          %v2189 = vrot.slane %v2174, %v2188
          %v2190 = vlaneseq
          %v2191 = vshrl.u32 %v2190, 7
          %v2192 = vsub.s32 0, %v2191
          %v2193 = vrot.slane %v2175, %v2192
          %v2194 = vlaneseq
          %v2195 = vshrl.u32 %v2194, 7
          %v2196 = vsub.s32 0, %v2195
          %v2197 = vrot.slane %v2176, %v2196
          %v2198 = vlaneseq
          %v2199 = vshrl.u32 %v2198, 7
          %v2200 = vsub.s32 0, %v2199
          %v2201 = vrot.slane %v2177, %v2200
          %v2206 = vmul.f32 %v2178, %v2189
          %v2207 = vmul.f32 %v2179, %v2193
          %v2208 = vmul.f32 %v2180, %v2197
          %v2209 = vmul.f32 %v2181, %v2201
          %2210 = vst [vmem:[%s318] sm:$0xff] %v2206
          %2211 = vst [vmem:[%s318 + $0x8] sm:$0xff] %v2207
          %2212 = vst [vmem:[%s318 + $0x10] sm:$0xff] %v2208
          %2213 = vst [vmem:[%s318 + $0x18] sm:$0xff] %v2209
        $region52: #{tpu_custom_call.1} parent=31 // pred_fallthru
          _
        %s2214 = sand.u32 %s151, 1
        %s2215 = scalar_lea.sflag [#allocation8], %s2214
        %s2216 = sand.u32 %s151, 1
        %s2217 = smul.addr %s2216, 32
        %s2218 = scalar_lea.vmem [#allocation12], %s2217
        // Predicated region
        $region53: #{tpu_custom_call.1} parent=31 // pred_check
          %p2219 = pneg %p161
        $region54: #{tpu_custom_call.1} parent=31 // pred_check_branch
          %2221 = sbr.rel (%p2219) target = $region56
        $region55: #{tpu_custom_call.1} parent=31 // pred_region
          %s2222 = smul.u32 4, %s30
          %s2224 = ssub.s32 512, 512
          %2225 = vsyncadd %s2215, %s2224
          %s2226 = sadd.s32 %s31, %s2222
          %s2227 = smul.addr %s29, 4
          %s2228 = sadd.s32 %s2226, %s2227
          %s2229 = smul.addr %s2228, 128
          %s2230 = scalar_lea.hbm %s3, %s2229
          %s2231 = sshll.u32 %s2218, 4
          %s2232 = int_to_ptr.vmem [resolvable:$true] %s2231
          %2237 = dma.vmem_to_hbm [thread:$0]  %s2232, 512, %s2230, %s2215, 128, 128, 8
        $region56: #{tpu_custom_call.1} parent=31 // pred_fallthru
          _
      $region32: #{tpu_custom_call.1} parent=5 // pred_fallthru
        _
      %p2238 = scmp.le.s32.totalorder 2, %s18
      // Predicated region
      $region57: #{tpu_custom_call.1} parent=5 // pred_check
        %p2239 = pneg %p2238
      $region58: #{tpu_custom_call.1} parent=5 // pred_check_branch
        %2241 = sbr.rel (%p2239) target = $region60
      $region59: #{tpu_custom_call.1} parent=5 // pred_region
        %s2242 = ssub.s32 %s18, 2
        // Predicated region
        $region61: #{tpu_custom_call.1} parent=59 // pred_check
          %p2243 = pneg %p167
        $region62: #{tpu_custom_call.1} parent=59 // pred_check_branch
          %2245 = sbr.rel (%p2243) target = $region64
        $region63: #{tpu_custom_call.1} parent=59 // pred_region
          %s2246 = sand.u32 %s152, 1
          %s2247 = scalar_lea.sflag [#allocation8], %s2246
          %s2248 = sand.u32 %s152, 1
          %s2249 = smul.addr %s2248, 32
          %s2250 = scalar_lea.vmem [#allocation12], %s2249
          %2251 = dma.done %s2247, 512
        $region64: #{tpu_custom_call.1} parent=59 // pred_fallthru
          _
      $region60: #{tpu_custom_call.1} parent=5 // pred_fallthru
        _
    $region6: #{tpu_custom_call.1} parent=1 // loop_footer
      %s22 = sadd.s32 1, %s18
    $region7: #{tpu_custom_call.1} parent=1 // loop_footer_branch
      %17 = sbr.rel target = $region3
    $region8: #{tpu_custom_call.1} parent=1 // loop_exit
      _
    %2252 = vsyncpa [#allocation7], 1
    %s2253 = scalar_lea.sflag [#allocation7], 1
    %2254 = vsyncpa %s2253, 1
    %2255 = vsyncpa [#allocation10], 1
    %s2256 = scalar_lea.sflag [#allocation10], 1
    %2257 = vsyncpa %s2256, 1
    %2258 = vsyncpa [#allocation8], 1
    %s2259 = scalar_lea.sflag [#allocation8], 1
    %2260 = vsyncpa %s2259, 1

</llo_original>
